<compile_context>
chip_gen: v7x
topology: tpu7x:2x2x1
jax: 0.10.0
libtpu: 0.0.40
codegen_flags: <defaults>
</compile_context>

<pallas_src>
import functools

import jax
import jax.numpy as jnp
from jax.experimental import pallas as pl
from jax.experimental.pallas import tpu as pltpu


# ----------------------------- fused Pallas kernel -----------------------------
def _depth_cnn_fused_kernel(x_ref, d_ref, w_ref, b_ref, o_ref, *,
                            kh, kw, dh, dw, th, w_out, wp, ph, pw):
    # x_ref: (C, TIN)    bf16  activation row-tile (+halo), flattened row-major over (TH_in, Wp)
    # d_ref: (1, TIN)    bf16  depth row-tile (+halo), same flattening
    # w_ref: (K, O, C)   bf16  per-tap weight matrices, pre-scaled by the module's 9.0
    # b_ref: (O, 1)      f32   bias
    # o_ref: (O, TH, W)  f32   output row-tile (directly in NCHW layout)
    pwidth = th * wp                      # positions per step (incl. phantom pad columns)
    center = ph * wp + pw                 # depth at the output position itself

    dc = d_ref[:, center:center + pwidth].astype(jnp.float32)           # (1, P)

    # Per-tap depth affinity exp(-(d_k - d_c)^2), normalized over the K taps.
    offs = [di * dh * wp + dj * dw for di in range(kh) for dj in range(kw)]
    wfs = []
    tot = None
    for off in offs:
        dt = d_ref[:, off:off + pwidth].astype(jnp.float32)
        wf = jnp.exp(-(dt - dc) ** 2)                                    # EUP
        wfs.append(wf)
        tot = wf if tot is None else tot + wf
    inv = pl.reciprocal(tot, approx=True)                                # (1, P), EUP

    # Per-tap reweight + small MXU contraction over channels, accumulated in f32.
    # (No (D, P) im2col temporary is ever materialized — review item #4.)
    acc = None
    for k, off in enumerate(offs):
        wk = (wfs[k] * inv).astype(jnp.bfloat16)                         # (1, P)
        xw = x_ref[:, off:off + pwidth] * wk                             # (C, P) bf16
        part = jnp.dot(w_ref[k], xw, preferred_element_type=jnp.float32)  # (O, P) f32
        acc = part if acc is None else acc + part
    acc = acc + b_ref[...]                                               # (O, P) + (O, 1)

    # Drop the phantom pad columns (row stride inside the tile is Wp, valid width is W).
    for ri in range(th):
        o_ref[:, ri, :] = acc[:, ri * wp: ri * wp + w_out].astype(o_ref.dtype)


# ----------------------------- wrapper -----------------------------
def depth_cnn2d_forward(x, g_buffer, weights_raw, bias, kernel_size,
                        dilation=(1, 1), padding=(0, 0), stride=(1, 1),
                        tile_rows=None):
    B, C, H, W = x.shape
    kh, kw = kernel_size
    dh, dw = dilation
    ph, pw = padding
    sh, sw = stride
    K = kh * kw
    D = C * K
    O = weights_raw.shape[-1]

    out_h = (H + 2 * ph - dh * (kh - 1) - 1) // sh + 1
    out_w = (W + 2 * pw - dw * (kw - 1) - 1) // sw + 1
    assert (sh, sw) == (1, 1) and (out_h, out_w) == (H, W), \
        "DepthCNN2d folds back to the input spatial size: 'same' output with stride 1 required"

    Wp = W + 2 * pw

    # --- output row-tile height: 8-aligned (or full H); keep >= 2 grid steps when B == 1 ---
    if tile_rows is None:
        TH = max(1, min(H, 8192 // max(Wp, 1), 64))
    else:
        TH = max(1, min(int(tile_rows), H))
    if B == 1 and TH >= H and H > 1:
        TH = (H + 1) // 2
    if TH < H:
        TH = min(max(8, (TH // 8) * 8), H)     # second-minor block dim: multiple of 8 or == H
    n_t = (H + TH - 1) // TH
    Hpad = n_t * TH
    TH_in = TH + (kh - 1) * dh                 # input rows per tile (incl. halo)
    TIN = TH_in * Wp + (kw - 1) * dw           # flattened tile length incl. right-edge overrun

    # depth plane from the last g_buffer channel, in [-1, 1]
    depth = 2.0 * (g_buffer[:, -1, :, :] - 0.5)                          # (B, H, W)

    # bf16 transport for both streams (all f32 math happens inside the kernel);
    # zero padding reproduces torch.unfold's implicit zero padding.
    xp = jnp.pad(x.astype(jnp.bfloat16),
                 ((0, 0), (0, 0), (ph, ph + Hpad - H), (pw, pw)))        # (B, C, Hpad+2ph, Wp)
    dp = jnp.pad(depth.astype(jnp.bfloat16),
                 ((0, 0), (ph, ph + Hpad - H), (pw, pw)))                # (B, Hpad+2ph, Wp)

    # Row tiles with halo, flattened so every unfold tap is a contiguous static lane slice.
    x_tiles = jnp.stack([xp[:, :, t * TH: t * TH + TH_in, :] for t in range(n_t)], axis=1)
    d_tiles = jnp.stack([dp[:, t * TH: t * TH + TH_in, :] for t in range(n_t)], axis=1)
    x_flat = x_tiles.reshape(B, n_t, C, TH_in * Wp)                      # (B, n_t, C, ...)
    d_flat = d_tiles.reshape(B, n_t, 1, TH_in * Wp)                      # (B, n_t, 1, ...)
    extra = TIN - TH_in * Wp
    if extra > 0:
        x_flat = jnp.pad(x_flat, ((0, 0), (0, 0), (0, 0), (0, extra)))
        d_flat = jnp.pad(d_flat, ((0, 0), (0, 0), (0, 0), (0, extra)))

    # Weights: torch's .view(O, -1) layout; the module's literal 9.0 normalization constant is
    # folded in here; rearranged into one small (O, C) matrix per tap; bf16 MXU operands.
    w_flat = weights_raw.reshape(O, D).astype(jnp.float32) * 9.0
    w_taps = jnp.transpose(w_flat.reshape(O, C, K), (2, 0, 1)).astype(jnp.bfloat16)  # (K, O, C)
    b2 = bias.reshape(O, 1).astype(jnp.float32)

    kernel = functools.partial(_depth_cnn_fused_kernel,
                               kh=kh, kw=kw, dh=dh, dw=dw,
                               th=TH, w_out=W, wp=Wp, ph=ph, pw=pw)
    out = pl.pallas_call(
        kernel,
        out_shape=jax.ShapeDtypeStruct((B, O, H, W), jnp.float32),
        grid_spec=pltpu.PrefetchScalarGridSpec(
            num_scalar_prefetch=0,
            grid=(B, n_t),
            in_specs=[
                pl.BlockSpec((None, None, C, TIN), lambda b, t: (b, t, 0, 0)),  # activations
                pl.BlockSpec((None, None, 1, TIN), lambda b, t: (b, t, 0, 0)),  # depth
                pl.BlockSpec((K, O, C), lambda b, t: (0, 0, 0)),                # per-tap weights
                pl.BlockSpec((O, 1), lambda b, t: (0, 0)),                      # bias
            ],
            out_specs=pl.BlockSpec((None, O, TH, W), lambda b, t: (b, 0, t, 0)),
        ),
        compiler_params=pltpu.CompilerParams(
            dimension_semantics=("parallel", "parallel"),
            vmem_limit_bytes=32 * 1024 * 1024),
    )(x_flat, d_flat, w_taps, b2)
    return out                                   # already (B, O, H, W)


# ----------------------------- pure-JAX reference -----------------------------
def unfold_nchw(x, kernel_size, dilation=(1, 1), padding=(0, 0), stride=(1, 1)):
    """torch.nn.functional.unfold semantics on NCHW input (reference only)."""
    B, C, H, W = x.shape
    kh, kw = kernel_size
    dh, dw = dilation
    ph, pw = padding
    sh, sw = stride
    xp = jnp.pad(x, ((0, 0), (0, 0), (ph, ph), (pw, pw)))
    Hp, Wp = H + 2 * ph, W + 2 * pw
    out_h = (Hp - dh * (kh - 1) - 1) // sh + 1
    out_w = (Wp - dw * (kw - 1) - 1) // sw + 1
    cols = []
    for i in range(kh):
        for j in range(kw):
            patch = xp[:, :,
                       i * dh: i * dh + sh * (out_h - 1) + 1: sh,
                       j * dw: j * dw + sw * (out_w - 1) + 1: sw]
            cols.append(patch.reshape(B, C, out_h * out_w))
    col = jnp.stack(cols, axis=2)                # (B, C, kh*kw, L)
    return col.reshape(B, C * kh * kw, out_h * out_w), (out_h, out_w)


def depth_cnn2d_reference(x, g_buffer, weights_raw, bias,
                          kernel_size, dilation=(1, 1), padding=(0, 0), stride=(1, 1)):
    B, C, H, W = x.shape
    kh, kw = kernel_size
    K = kh * kw
    O = weights_raw.shape[-1]
    depth = 2.0 * (g_buffer[:, -1:, :, :] - 0.5)
    input_unf, _ = unfold_nchw(x, kernel_size, dilation, padding, stride)
    depth_unf, _ = unfold_nchw(depth, kernel_size, dilation, padding, stride)
    df = depth_unf.reshape(B, 1, K, -1) - depth.reshape(B, 1, 1, -1)
    df = (df ** 2).sum(axis=1)                                  # (B, K, L)
    wf = jnp.exp(-df)
    wf = 9.0 * wf / wf.sum(axis=1, keepdims=True)               # module's literal 9.0
    filt = input_unf.reshape(B, C, K, -1) * wf[:, None, :, :]
    inp2 = filt.reshape(B, C * K, -1)
    w_mat = weights_raw.reshape(O, -1)                          # torch .view(O, -1)
    out_unf = jnp.einsum('bdl,od->bol', inp2, w_mat)
    return out_unf.reshape(B, O, H, W) + bias.reshape(1, -1, 1, 1)


# ----------------------------- main -----------------------------
if __name__ == "__main__":
    key = jax.random.PRNGKey(0)
    kx, kg, kw_ = jax.random.split(key, 3)

    # small shapes consistent with the module
    B, C_in, H, W = 2, 4, 16, 16
    G_ch = 3
    out_channels = 8
    kernel_size = (3, 3)
    dilation = (1, 1)
    padding = (1, 1)     # 'same' output so fold to (H, W) is valid
    stride = (1, 1)

    K = kernel_size[0] * kernel_size[1]
    D = C_in * K

    x = jax.random.normal(kx, (B, C_in, H, W), dtype=jnp.float32)
    g_buffer = jax.random.uniform(kg, (B, G_ch, H, W), dtype=jnp.float32)

    # deterministic kaiming_uniform-style init on (1, D, 1, O); bias = 0
    fan_in = D * out_channels   # torch fan_in for this 4-D shape: size(1) * prod(size(2:))
    bound = (6.0 / fan_in) ** 0.5
    weights_raw = jax.random.uniform(
        kw_, (1, D, 1, out_channels), dtype=jnp.float32, minval=-bound, maxval=bound)
    bias = jnp.zeros((out_channels,), dtype=jnp.float32)

    out = depth_cnn2d_forward(x, g_buffer, weights_raw, bias,
                              kernel_size, dilation, padding, stride,
                              tile_rows=8)   # 2 row tiles -> grid (2, 2), exercises the halo path
    out = jax.block_until_ready(out)

    ref = depth_cnn2d_reference(x, g_buffer, weights_raw, bias,
                                kernel_size, dilation, padding, stride)
    assert out.shape == (B, out_channels, H, W)
    # tolerance accounts for bf16 activations/depth/weights + approximate reciprocal
    assert jnp.allclose(out, ref, rtol=3e-2, atol=5e-2), "mismatch vs reference"

    print("KERNEL_OK")
</pallas_src>

<mosaic_0001>
module attributes {stable_mosaic.version = 11 : i64} {
  func.func @_depth_cnn_fused_kernel(%arg0: i32, %arg1: i32, %arg2: memref<1x1x4x182xbf16, #tpu.memory_space<vmem>>, %arg3: memref<1x1x1x182xbf16, #tpu.memory_space<vmem>>, %arg4: memref<9x8x4xbf16, #tpu.memory_space<vmem>>, %arg5: memref<8x1xf32, #tpu.memory_space<vmem>>, %arg6: memref<1x8x8x16xf32, #tpu.memory_space<vmem>>) attributes {dimension_semantics = [#tpu.dimension_semantics<parallel>, #tpu.dimension_semantics<parallel>], iteration_bounds = array<i64: 2, 2>, scalar_prefetch = 0 : i64, scratch_operands = 0 : i64, tpu.core_type = #tpu.core_type<tc>, window_params = [{transform_indices = @transform_0, window_bounds = array<i64: 1, 1, 4, 182>}, {transform_indices = @transform_1, window_bounds = array<i64: 1, 1, 1, 182>}, {pipeline_mode = #tpu.pipeline_mode<synchronous>, transform_indices = @transform_2, window_bounds = array<i64: 9, 8, 4>}, {pipeline_mode = #tpu.pipeline_mode<synchronous>, transform_indices = @transform_3, window_bounds = array<i64: 8, 1>}, {transform_indices = @transform_4, window_bounds = array<i64: 1, 8, 8, 16>}]} {
    %c0 = arith.constant 0 : index
    %c0_0 = arith.constant 0 : index
    %c0_1 = arith.constant 0 : index
    %c19 = arith.constant 19 : index
    %0 = vector.load %arg3[%c0, %c0_0, %c0_1, %c19] : memref<1x1x1x182xbf16, #tpu.memory_space<vmem>>, vector<1x1x1x144xbf16>
    %1 = vector.shape_cast %0 : vector<1x1x1x144xbf16> to vector<1x144xbf16>
    %2 = arith.extf %1 : vector<1x144xbf16> to vector<1x144xf32>
    %c0_2 = arith.constant 0 : index
    %c0_3 = arith.constant 0 : index
    %c0_4 = arith.constant 0 : index
    %c0_5 = arith.constant 0 : index
    %3 = vector.load %arg3[%c0_2, %c0_3, %c0_4, %c0_5] : memref<1x1x1x182xbf16, #tpu.memory_space<vmem>>, vector<1x1x1x144xbf16>
    %4 = vector.shape_cast %3 : vector<1x1x1x144xbf16> to vector<1x144xbf16>
    %5 = arith.extf %4 : vector<1x144xbf16> to vector<1x144xf32>
    %6 = arith.subf %5, %2 : vector<1x144xf32>
    %7 = arith.mulf %6, %6 : vector<1x144xf32>
    %cst = arith.constant 0.000000e+00 : f32
    %8 = vector.broadcast %cst : f32 to vector<1x144xf32>
    %9 = arith.subf %8, %7 : vector<1x144xf32>
    %10 = math.exp %9 : vector<1x144xf32>
    %c0_6 = arith.constant 0 : index
    %c0_7 = arith.constant 0 : index
    %c0_8 = arith.constant 0 : index
    %c1 = arith.constant 1 : index
    %11 = vector.load %arg3[%c0_6, %c0_7, %c0_8, %c1] : memref<1x1x1x182xbf16, #tpu.memory_space<vmem>>, vector<1x1x1x144xbf16>
    %12 = vector.shape_cast %11 : vector<1x1x1x144xbf16> to vector<1x144xbf16>
    %13 = arith.extf %12 : vector<1x144xbf16> to vector<1x144xf32>
    %14 = arith.subf %13, %2 : vector<1x144xf32>
    %15 = arith.mulf %14, %14 : vector<1x144xf32>
    %cst_9 = arith.constant 0.000000e+00 : f32
    %16 = vector.broadcast %cst_9 : f32 to vector<1x144xf32>
    %17 = arith.subf %16, %15 : vector<1x144xf32>
    %18 = math.exp %17 : vector<1x144xf32>
    %19 = arith.addf %10, %18 : vector<1x144xf32>
    %c0_10 = arith.constant 0 : index
    %c0_11 = arith.constant 0 : index
    %c0_12 = arith.constant 0 : index
    %c2 = arith.constant 2 : index
    %20 = vector.load %arg3[%c0_10, %c0_11, %c0_12, %c2] : memref<1x1x1x182xbf16, #tpu.memory_space<vmem>>, vector<1x1x1x144xbf16>
    %21 = vector.shape_cast %20 : vector<1x1x1x144xbf16> to vector<1x144xbf16>
    %22 = arith.extf %21 : vector<1x144xbf16> to vector<1x144xf32>
    %23 = arith.subf %22, %2 : vector<1x144xf32>
    %24 = arith.mulf %23, %23 : vector<1x144xf32>
    %cst_13 = arith.constant 0.000000e+00 : f32
    %25 = vector.broadcast %cst_13 : f32 to vector<1x144xf32>
    %26 = arith.subf %25, %24 : vector<1x144xf32>
    %27 = math.exp %26 : vector<1x144xf32>
    %28 = arith.addf %19, %27 : vector<1x144xf32>
    %c0_14 = arith.constant 0 : index
    %c0_15 = arith.constant 0 : index
    %c0_16 = arith.constant 0 : index
    %c18 = arith.constant 18 : index
    %29 = vector.load %arg3[%c0_14, %c0_15, %c0_16, %c18] : memref<1x1x1x182xbf16, #tpu.memory_space<vmem>>, vector<1x1x1x144xbf16>
    %30 = vector.shape_cast %29 : vector<1x1x1x144xbf16> to vector<1x144xbf16>
    %31 = arith.extf %30 : vector<1x144xbf16> to vector<1x144xf32>
    %32 = arith.subf %31, %2 : vector<1x144xf32>
    %33 = arith.mulf %32, %32 : vector<1x144xf32>
    %cst_17 = arith.constant 0.000000e+00 : f32
    %34 = vector.broadcast %cst_17 : f32 to vector<1x144xf32>
    %35 = arith.subf %34, %33 : vector<1x144xf32>
    %36 = math.exp %35 : vector<1x144xf32>
    %37 = arith.addf %28, %36 : vector<1x144xf32>
    %c0_18 = arith.constant 0 : index
    %c0_19 = arith.constant 0 : index
    %c0_20 = arith.constant 0 : index
    %c19_21 = arith.constant 19 : index
    %38 = vector.load %arg3[%c0_18, %c0_19, %c0_20, %c19_21] : memref<1x1x1x182xbf16, #tpu.memory_space<vmem>>, vector<1x1x1x144xbf16>
    %39 = vector.shape_cast %38 : vector<1x1x1x144xbf16> to vector<1x144xbf16>
    %40 = arith.extf %39 : vector<1x144xbf16> to vector<1x144xf32>
    %41 = arith.subf %40, %2 : vector<1x144xf32>
    %42 = arith.mulf %41, %41 : vector<1x144xf32>
    %cst_22 = arith.constant 0.000000e+00 : f32
    %43 = vector.broadcast %cst_22 : f32 to vector<1x144xf32>
    %44 = arith.subf %43, %42 : vector<1x144xf32>
    %45 = math.exp %44 : vector<1x144xf32>
    %46 = arith.addf %37, %45 : vector<1x144xf32>
    %c0_23 = arith.constant 0 : index
    %c0_24 = arith.constant 0 : index
    %c0_25 = arith.constant 0 : index
    %c20 = arith.constant 20 : index
    %47 = vector.load %arg3[%c0_23, %c0_24, %c0_25, %c20] : memref<1x1x1x182xbf16, #tpu.memory_space<vmem>>, vector<1x1x1x144xbf16>
    %48 = vector.shape_cast %47 : vector<1x1x1x144xbf16> to vector<1x144xbf16>
    %49 = arith.extf %48 : vector<1x144xbf16> to vector<1x144xf32>
    %50 = arith.subf %49, %2 : vector<1x144xf32>
    %51 = arith.mulf %50, %50 : vector<1x144xf32>
    %cst_26 = arith.constant 0.000000e+00 : f32
    %52 = vector.broadcast %cst_26 : f32 to vector<1x144xf32>
    %53 = arith.subf %52, %51 : vector<1x144xf32>
    %54 = math.exp %53 : vector<1x144xf32>
    %55 = arith.addf %46, %54 : vector<1x144xf32>
    %c0_27 = arith.constant 0 : index
    %c0_28 = arith.constant 0 : index
    %c0_29 = arith.constant 0 : index
    %c36 = arith.constant 36 : index
    %56 = vector.load %arg3[%c0_27, %c0_28, %c0_29, %c36] : memref<1x1x1x182xbf16, #tpu.memory_space<vmem>>, vector<1x1x1x144xbf16>
    %57 = vector.shape_cast %56 : vector<1x1x1x144xbf16> to vector<1x144xbf16>
    %58 = arith.extf %57 : vector<1x144xbf16> to vector<1x144xf32>
    %59 = arith.subf %58, %2 : vector<1x144xf32>
    %60 = arith.mulf %59, %59 : vector<1x144xf32>
    %cst_30 = arith.constant 0.000000e+00 : f32
    %61 = vector.broadcast %cst_30 : f32 to vector<1x144xf32>
    %62 = arith.subf %61, %60 : vector<1x144xf32>
    %63 = math.exp %62 : vector<1x144xf32>
    %64 = arith.addf %55, %63 : vector<1x144xf32>
    %c0_31 = arith.constant 0 : index
    %c0_32 = arith.constant 0 : index
    %c0_33 = arith.constant 0 : index
    %c37 = arith.constant 37 : index
    %65 = vector.load %arg3[%c0_31, %c0_32, %c0_33, %c37] : memref<1x1x1x182xbf16, #tpu.memory_space<vmem>>, vector<1x1x1x144xbf16>
    %66 = vector.shape_cast %65 : vector<1x1x1x144xbf16> to vector<1x144xbf16>
    %67 = arith.extf %66 : vector<1x144xbf16> to vector<1x144xf32>
    %68 = arith.subf %67, %2 : vector<1x144xf32>
    %69 = arith.mulf %68, %68 : vector<1x144xf32>
    %cst_34 = arith.constant 0.000000e+00 : f32
    %70 = vector.broadcast %cst_34 : f32 to vector<1x144xf32>
    %71 = arith.subf %70, %69 : vector<1x144xf32>
    %72 = math.exp %71 : vector<1x144xf32>
    %73 = arith.addf %64, %72 : vector<1x144xf32>
    %c0_35 = arith.constant 0 : index
    %c0_36 = arith.constant 0 : index
    %c0_37 = arith.constant 0 : index
    %c38 = arith.constant 38 : index
    %74 = vector.load %arg3[%c0_35, %c0_36, %c0_37, %c38] : memref<1x1x1x182xbf16, #tpu.memory_space<vmem>>, vector<1x1x1x144xbf16>
    %75 = vector.shape_cast %74 : vector<1x1x1x144xbf16> to vector<1x144xbf16>
    %76 = arith.extf %75 : vector<1x144xbf16> to vector<1x144xf32>
    %77 = arith.subf %76, %2 : vector<1x144xf32>
    %78 = arith.mulf %77, %77 : vector<1x144xf32>
    %cst_38 = arith.constant 0.000000e+00 : f32
    %79 = vector.broadcast %cst_38 : f32 to vector<1x144xf32>
    %80 = arith.subf %79, %78 : vector<1x144xf32>
    %81 = math.exp %80 : vector<1x144xf32>
    %82 = arith.addf %73, %81 : vector<1x144xf32>
    %83 = tpu.reciprocal %82 {approx = true} : vector<1x144xf32> -> vector<1x144xf32>
    %84 = arith.mulf %10, %83 : vector<1x144xf32>
    %85 = arith.truncf %84 : vector<1x144xf32> to vector<1x144xbf16>
    %c0_39 = arith.constant 0 : index
    %c0_40 = arith.constant 0 : index
    %c0_41 = arith.constant 0 : index
    %c0_42 = arith.constant 0 : index
    %86 = vector.load %arg2[%c0_39, %c0_40, %c0_41, %c0_42] : memref<1x1x4x182xbf16, #tpu.memory_space<vmem>>, vector<1x1x4x144xbf16>
    %87 = vector.shape_cast %86 : vector<1x1x4x144xbf16> to vector<4x144xbf16>
    %88 = vector.broadcast %85 : vector<1x144xbf16> to vector<4x144xbf16>
    %89 = arith.mulf %87, %88 : vector<4x144xbf16>
    %c0_43 = arith.constant 0 : index
    %c0_44 = arith.constant 0 : index
    %c0_45 = arith.constant 0 : index
    %90 = vector.load %arg4[%c0_43, %c0_44, %c0_45] : memref<9x8x4xbf16, #tpu.memory_space<vmem>>, vector<1x8x4xbf16>
    %91 = vector.shape_cast %90 : vector<1x8x4xbf16> to vector<8x4xbf16>
    %cst_46 = arith.constant dense<0.000000e+00> : vector<8x144xf32>
    %92 = tpu.matmul %91, %89, %cst_46 {dimension_numbers = #tpu.dot_dimension_numbers<[1], [0], [0], [1], [0, 0, 1, 1], [], []>} : vector<8x4xbf16>, vector<4x144xbf16>, vector<8x144xf32> -> vector<8x144xf32>
    %93 = arith.mulf %18, %83 : vector<1x144xf32>
    %94 = arith.truncf %93 : vector<1x144xf32> to vector<1x144xbf16>
    %c0_47 = arith.constant 0 : index
    %c0_48 = arith.constant 0 : index
    %c0_49 = arith.constant 0 : index
    %c1_50 = arith.constant 1 : index
    %95 = vector.load %arg2[%c0_47, %c0_48, %c0_49, %c1_50] : memref<1x1x4x182xbf16, #tpu.memory_space<vmem>>, vector<1x1x4x144xbf16>
    %96 = vector.shape_cast %95 : vector<1x1x4x144xbf16> to vector<4x144xbf16>
    %97 = vector.broadcast %94 : vector<1x144xbf16> to vector<4x144xbf16>
    %98 = arith.mulf %96, %97 : vector<4x144xbf16>
    %c1_51 = arith.constant 1 : index
    %c0_52 = arith.constant 0 : index
    %c0_53 = arith.constant 0 : index
    %99 = vector.load %arg4[%c1_51, %c0_52, %c0_53] : memref<9x8x4xbf16, #tpu.memory_space<vmem>>, vector<1x8x4xbf16>
    %100 = vector.shape_cast %99 : vector<1x8x4xbf16> to vector<8x4xbf16>
    %cst_54 = arith.constant dense<0.000000e+00> : vector<8x144xf32>
    %101 = tpu.matmul %100, %98, %cst_54 {dimension_numbers = #tpu.dot_dimension_numbers<[1], [0], [0], [1], [0, 0, 1, 1], [], []>} : vector<8x4xbf16>, vector<4x144xbf16>, vector<8x144xf32> -> vector<8x144xf32>
    %102 = arith.addf %92, %101 : vector<8x144xf32>
    %103 = arith.mulf %27, %83 : vector<1x144xf32>
    %104 = arith.truncf %103 : vector<1x144xf32> to vector<1x144xbf16>
    %c0_55 = arith.constant 0 : index
    %c0_56 = arith.constant 0 : index
    %c0_57 = arith.constant 0 : index
    %c2_58 = arith.constant 2 : index
    %105 = vector.load %arg2[%c0_55, %c0_56, %c0_57, %c2_58] : memref<1x1x4x182xbf16, #tpu.memory_space<vmem>>, vector<1x1x4x144xbf16>
    %106 = vector.shape_cast %105 : vector<1x1x4x144xbf16> to vector<4x144xbf16>
    %107 = vector.broadcast %104 : vector<1x144xbf16> to vector<4x144xbf16>
    %108 = arith.mulf %106, %107 : vector<4x144xbf16>
    %c2_59 = arith.constant 2 : index
    %c0_60 = arith.constant 0 : index
    %c0_61 = arith.constant 0 : index
    %109 = vector.load %arg4[%c2_59, %c0_60, %c0_61] : memref<9x8x4xbf16, #tpu.memory_space<vmem>>, vector<1x8x4xbf16>
    %110 = vector.shape_cast %109 : vector<1x8x4xbf16> to vector<8x4xbf16>
    %cst_62 = arith.constant dense<0.000000e+00> : vector<8x144xf32>
    %111 = tpu.matmul %110, %108, %cst_62 {dimension_numbers = #tpu.dot_dimension_numbers<[1], [0], [0], [1], [0, 0, 1, 1], [], []>} : vector<8x4xbf16>, vector<4x144xbf16>, vector<8x144xf32> -> vector<8x144xf32>
    %112 = arith.addf %102, %111 : vector<8x144xf32>
    %113 = arith.mulf %36, %83 : vector<1x144xf32>
    %114 = arith.truncf %113 : vector<1x144xf32> to vector<1x144xbf16>
    %c0_63 = arith.constant 0 : index
    %c0_64 = arith.constant 0 : index
    %c0_65 = arith.constant 0 : index
    %c18_66 = arith.constant 18 : index
    %115 = vector.load %arg2[%c0_63, %c0_64, %c0_65, %c18_66] : memref<1x1x4x182xbf16, #tpu.memory_space<vmem>>, vector<1x1x4x144xbf16>
    %116 = vector.shape_cast %115 : vector<1x1x4x144xbf16> to vector<4x144xbf16>
    %117 = vector.broadcast %114 : vector<1x144xbf16> to vector<4x144xbf16>
    %118 = arith.mulf %116, %117 : vector<4x144xbf16>
    %c3 = arith.constant 3 : index
    %c0_67 = arith.constant 0 : index
    %c0_68 = arith.constant 0 : index
    %119 = vector.load %arg4[%c3, %c0_67, %c0_68] : memref<9x8x4xbf16, #tpu.memory_space<vmem>>, vector<1x8x4xbf16>
    %120 = vector.shape_cast %119 : vector<1x8x4xbf16> to vector<8x4xbf16>
    %cst_69 = arith.constant dense<0.000000e+00> : vector<8x144xf32>
    %121 = tpu.matmul %120, %118, %cst_69 {dimension_numbers = #tpu.dot_dimension_numbers<[1], [0], [0], [1], [0, 0, 1, 1], [], []>} : vector<8x4xbf16>, vector<4x144xbf16>, vector<8x144xf32> -> vector<8x144xf32>
    %122 = arith.addf %112, %121 : vector<8x144xf32>
    %123 = arith.mulf %45, %83 : vector<1x144xf32>
    %124 = arith.truncf %123 : vector<1x144xf32> to vector<1x144xbf16>
    %c0_70 = arith.constant 0 : index
    %c0_71 = arith.constant 0 : index
    %c0_72 = arith.constant 0 : index
    %c19_73 = arith.constant 19 : index
    %125 = vector.load %arg2[%c0_70, %c0_71, %c0_72, %c19_73] : memref<1x1x4x182xbf16, #tpu.memory_space<vmem>>, vector<1x1x4x144xbf16>
    %126 = vector.shape_cast %125 : vector<1x1x4x144xbf16> to vector<4x144xbf16>
    %127 = vector.broadcast %124 : vector<1x144xbf16> to vector<4x144xbf16>
    %128 = arith.mulf %126, %127 : vector<4x144xbf16>
    %c4 = arith.constant 4 : index
    %c0_74 = arith.constant 0 : index
    %c0_75 = arith.constant 0 : index
    %129 = vector.load %arg4[%c4, %c0_74, %c0_75] : memref<9x8x4xbf16, #tpu.memory_space<vmem>>, vector<1x8x4xbf16>
    %130 = vector.shape_cast %129 : vector<1x8x4xbf16> to vector<8x4xbf16>
    %cst_76 = arith.constant dense<0.000000e+00> : vector<8x144xf32>
    %131 = tpu.matmul %130, %128, %cst_76 {dimension_numbers = #tpu.dot_dimension_numbers<[1], [0], [0], [1], [0, 0, 1, 1], [], []>} : vector<8x4xbf16>, vector<4x144xbf16>, vector<8x144xf32> -> vector<8x144xf32>
    %132 = arith.addf %122, %131 : vector<8x144xf32>
    %133 = arith.mulf %54, %83 : vector<1x144xf32>
    %134 = arith.truncf %133 : vector<1x144xf32> to vector<1x144xbf16>
    %c0_77 = arith.constant 0 : index
    %c0_78 = arith.constant 0 : index
    %c0_79 = arith.constant 0 : index
    %c20_80 = arith.constant 20 : index
    %135 = vector.load %arg2[%c0_77, %c0_78, %c0_79, %c20_80] : memref<1x1x4x182xbf16, #tpu.memory_space<vmem>>, vector<1x1x4x144xbf16>
    %136 = vector.shape_cast %135 : vector<1x1x4x144xbf16> to vector<4x144xbf16>
    %137 = vector.broadcast %134 : vector<1x144xbf16> to vector<4x144xbf16>
    %138 = arith.mulf %136, %137 : vector<4x144xbf16>
    %c5 = arith.constant 5 : index
    %c0_81 = arith.constant 0 : index
    %c0_82 = arith.constant 0 : index
    %139 = vector.load %arg4[%c5, %c0_81, %c0_82] : memref<9x8x4xbf16, #tpu.memory_space<vmem>>, vector<1x8x4xbf16>
    %140 = vector.shape_cast %139 : vector<1x8x4xbf16> to vector<8x4xbf16>
    %cst_83 = arith.constant dense<0.000000e+00> : vector<8x144xf32>
    %141 = tpu.matmul %140, %138, %cst_83 {dimension_numbers = #tpu.dot_dimension_numbers<[1], [0], [0], [1], [0, 0, 1, 1], [], []>} : vector<8x4xbf16>, vector<4x144xbf16>, vector<8x144xf32> -> vector<8x144xf32>
    %142 = arith.addf %132, %141 : vector<8x144xf32>
    %143 = arith.mulf %63, %83 : vector<1x144xf32>
    %144 = arith.truncf %143 : vector<1x144xf32> to vector<1x144xbf16>
    %c0_84 = arith.constant 0 : index
    %c0_85 = arith.constant 0 : index
    %c0_86 = arith.constant 0 : index
    %c36_87 = arith.constant 36 : index
    %145 = vector.load %arg2[%c0_84, %c0_85, %c0_86, %c36_87] : memref<1x1x4x182xbf16, #tpu.memory_space<vmem>>, vector<1x1x4x144xbf16>
    %146 = vector.shape_cast %145 : vector<1x1x4x144xbf16> to vector<4x144xbf16>
    %147 = vector.broadcast %144 : vector<1x144xbf16> to vector<4x144xbf16>
    %148 = arith.mulf %146, %147 : vector<4x144xbf16>
    %c6 = arith.constant 6 : index
    %c0_88 = arith.constant 0 : index
    %c0_89 = arith.constant 0 : index
    %149 = vector.load %arg4[%c6, %c0_88, %c0_89] : memref<9x8x4xbf16, #tpu.memory_space<vmem>>, vector<1x8x4xbf16>
    %150 = vector.shape_cast %149 : vector<1x8x4xbf16> to vector<8x4xbf16>
    %cst_90 = arith.constant dense<0.000000e+00> : vector<8x144xf32>
    %151 = tpu.matmul %150, %148, %cst_90 {dimension_numbers = #tpu.dot_dimension_numbers<[1], [0], [0], [1], [0, 0, 1, 1], [], []>} : vector<8x4xbf16>, vector<4x144xbf16>, vector<8x144xf32> -> vector<8x144xf32>
    %152 = arith.addf %142, %151 : vector<8x144xf32>
    %153 = arith.mulf %72, %83 : vector<1x144xf32>
    %154 = arith.truncf %153 : vector<1x144xf32> to vector<1x144xbf16>
    %c0_91 = arith.constant 0 : index
    %c0_92 = arith.constant 0 : index
    %c0_93 = arith.constant 0 : index
    %c37_94 = arith.constant 37 : index
    %155 = vector.load %arg2[%c0_91, %c0_92, %c0_93, %c37_94] : memref<1x1x4x182xbf16, #tpu.memory_space<vmem>>, vector<1x1x4x144xbf16>
    %156 = vector.shape_cast %155 : vector<1x1x4x144xbf16> to vector<4x144xbf16>
    %157 = vector.broadcast %154 : vector<1x144xbf16> to vector<4x144xbf16>
    %158 = arith.mulf %156, %157 : vector<4x144xbf16>
    %c7 = arith.constant 7 : index
    %c0_95 = arith.constant 0 : index
    %c0_96 = arith.constant 0 : index
    %159 = vector.load %arg4[%c7, %c0_95, %c0_96] : memref<9x8x4xbf16, #tpu.memory_space<vmem>>, vector<1x8x4xbf16>
    %160 = vector.shape_cast %159 : vector<1x8x4xbf16> to vector<8x4xbf16>
    %cst_97 = arith.constant dense<0.000000e+00> : vector<8x144xf32>
    %161 = tpu.matmul %160, %158, %cst_97 {dimension_numbers = #tpu.dot_dimension_numbers<[1], [0], [0], [1], [0, 0, 1, 1], [], []>} : vector<8x4xbf16>, vector<4x144xbf16>, vector<8x144xf32> -> vector<8x144xf32>
    %162 = arith.addf %152, %161 : vector<8x144xf32>
    %163 = arith.mulf %81, %83 : vector<1x144xf32>
    %164 = arith.truncf %163 : vector<1x144xf32> to vector<1x144xbf16>
    %c0_98 = arith.constant 0 : index
    %c0_99 = arith.constant 0 : index
    %c0_100 = arith.constant 0 : index
    %c38_101 = arith.constant 38 : index
    %165 = vector.load %arg2[%c0_98, %c0_99, %c0_100, %c38_101] : memref<1x1x4x182xbf16, #tpu.memory_space<vmem>>, vector<1x1x4x144xbf16>
    %166 = vector.shape_cast %165 : vector<1x1x4x144xbf16> to vector<4x144xbf16>
    %167 = vector.broadcast %164 : vector<1x144xbf16> to vector<4x144xbf16>
    %168 = arith.mulf %166, %167 : vector<4x144xbf16>
    %c8 = arith.constant 8 : index
    %c0_102 = arith.constant 0 : index
    %c0_103 = arith.constant 0 : index
    %169 = vector.load %arg4[%c8, %c0_102, %c0_103] : memref<9x8x4xbf16, #tpu.memory_space<vmem>>, vector<1x8x4xbf16>
    %170 = vector.shape_cast %169 : vector<1x8x4xbf16> to vector<8x4xbf16>
    %cst_104 = arith.constant dense<0.000000e+00> : vector<8x144xf32>
    %171 = tpu.matmul %170, %168, %cst_104 {dimension_numbers = #tpu.dot_dimension_numbers<[1], [0], [0], [1], [0, 0, 1, 1], [], []>} : vector<8x4xbf16>, vector<4x144xbf16>, vector<8x144xf32> -> vector<8x144xf32>
    %172 = arith.addf %162, %171 : vector<8x144xf32>
    %c0_105 = arith.constant 0 : index
    %c0_106 = arith.constant 0 : index
    %173 = vector.load %arg5[%c0_105, %c0_106] : memref<8x1xf32, #tpu.memory_space<vmem>>, vector<8x1xf32>
    %174 = vector.broadcast %173 : vector<8x1xf32> to vector<8x144xf32>
    %175 = arith.addf %172, %174 : vector<8x144xf32>
    %176 = vector.extract_strided_slice %175 {offsets = [0, 0], sizes = [8, 16], strides = [1, 1]} : vector<8x144xf32> to vector<8x16xf32>
    %c0_107 = arith.constant 0 : index
    %c0_108 = arith.constant 0 : index
    %c0_109 = arith.constant 0 : index
    %c0_110 = arith.constant 0 : index
    %177 = vector.load %arg6[%c0_107, %c0_108, %c0_109, %c0_110] : memref<1x8x8x16xf32, #tpu.memory_space<vmem>>, vector<1x8x1x16xf32>
    %178 = vector.shape_cast %177 : vector<1x8x1x16xf32> to vector<8x16xf32>
    %179 = vector.shape_cast %176 : vector<8x16xf32> to vector<1x8x1x16xf32>
    tpu.vector_store %arg6[%c0_107, %c0_108, %c0_109, %c0_110], %179 {strides = array<i32>} : memref<1x8x8x16xf32, #tpu.memory_space<vmem>>, vector<1x8x1x16xf32>,
    %180 = vector.extract_strided_slice %175 {offsets = [0, 18], sizes = [8, 16], strides = [1, 1]} : vector<8x144xf32> to vector<8x16xf32>
    %c0_111 = arith.constant 0 : index
    %c0_112 = arith.constant 0 : index
    %c1_113 = arith.constant 1 : index
    %c0_114 = arith.constant 0 : index
    %181 = vector.load %arg6[%c0_111, %c0_112, %c1_113, %c0_114] : memref<1x8x8x16xf32, #tpu.memory_space<vmem>>, vector<1x8x1x16xf32>
    %182 = vector.shape_cast %181 : vector<1x8x1x16xf32> to vector<8x16xf32>
    %183 = vector.shape_cast %180 : vector<8x16xf32> to vector<1x8x1x16xf32>
    tpu.vector_store %arg6[%c0_111, %c0_112, %c1_113, %c0_114], %183 {strides = array<i32>} : memref<1x8x8x16xf32, #tpu.memory_space<vmem>>, vector<1x8x1x16xf32>,
    %184 = vector.extract_strided_slice %175 {offsets = [0, 36], sizes = [8, 16], strides = [1, 1]} : vector<8x144xf32> to vector<8x16xf32>
    %c0_115 = arith.constant 0 : index
    %c0_116 = arith.constant 0 : index
    %c2_117 = arith.constant 2 : index
    %c0_118 = arith.constant 0 : index
    %185 = vector.load %arg6[%c0_115, %c0_116, %c2_117, %c0_118] : memref<1x8x8x16xf32, #tpu.memory_space<vmem>>, vector<1x8x1x16xf32>
    %186 = vector.shape_cast %185 : vector<1x8x1x16xf32> to vector<8x16xf32>
    %187 = vector.shape_cast %184 : vector<8x16xf32> to vector<1x8x1x16xf32>
    tpu.vector_store %arg6[%c0_115, %c0_116, %c2_117, %c0_118], %187 {strides = array<i32>} : memref<1x8x8x16xf32, #tpu.memory_space<vmem>>, vector<1x8x1x16xf32>,
    %188 = vector.extract_strided_slice %175 {offsets = [0, 54], sizes = [8, 16], strides = [1, 1]} : vector<8x144xf32> to vector<8x16xf32>
    %c0_119 = arith.constant 0 : index
    %c0_120 = arith.constant 0 : index
    %c3_121 = arith.constant 3 : index
    %c0_122 = arith.constant 0 : index
    %189 = vector.load %arg6[%c0_119, %c0_120, %c3_121, %c0_122] : memref<1x8x8x16xf32, #tpu.memory_space<vmem>>, vector<1x8x1x16xf32>
    %190 = vector.shape_cast %189 : vector<1x8x1x16xf32> to vector<8x16xf32>
    %191 = vector.shape_cast %188 : vector<8x16xf32> to vector<1x8x1x16xf32>
    tpu.vector_store %arg6[%c0_119, %c0_120, %c3_121, %c0_122], %191 {strides = array<i32>} : memref<1x8x8x16xf32, #tpu.memory_space<vmem>>, vector<1x8x1x16xf32>,
    %192 = vector.extract_strided_slice %175 {offsets = [0, 72], sizes = [8, 16], strides = [1, 1]} : vector<8x144xf32> to vector<8x16xf32>
    %c0_123 = arith.constant 0 : index
    %c0_124 = arith.constant 0 : index
    %c4_125 = arith.constant 4 : index
    %c0_126 = arith.constant 0 : index
    %193 = vector.load %arg6[%c0_123, %c0_124, %c4_125, %c0_126] : memref<1x8x8x16xf32, #tpu.memory_space<vmem>>, vector<1x8x1x16xf32>
    %194 = vector.shape_cast %193 : vector<1x8x1x16xf32> to vector<8x16xf32>
    %195 = vector.shape_cast %192 : vector<8x16xf32> to vector<1x8x1x16xf32>
    tpu.vector_store %arg6[%c0_123, %c0_124, %c4_125, %c0_126], %195 {strides = array<i32>} : memref<1x8x8x16xf32, #tpu.memory_space<vmem>>, vector<1x8x1x16xf32>,
    %196 = vector.extract_strided_slice %175 {offsets = [0, 90], sizes = [8, 16], strides = [1, 1]} : vector<8x144xf32> to vector<8x16xf32>
    %c0_127 = arith.constant 0 : index
    %c0_128 = arith.constant 0 : index
    %c5_129 = arith.constant 5 : index
    %c0_130 = arith.constant 0 : index
    %197 = vector.load %arg6[%c0_127, %c0_128, %c5_129, %c0_130] : memref<1x8x8x16xf32, #tpu.memory_space<vmem>>, vector<1x8x1x16xf32>
    %198 = vector.shape_cast %197 : vector<1x8x1x16xf32> to vector<8x16xf32>
    %199 = vector.shape_cast %196 : vector<8x16xf32> to vector<1x8x1x16xf32>
    tpu.vector_store %arg6[%c0_127, %c0_128, %c5_129, %c0_130], %199 {strides = array<i32>} : memref<1x8x8x16xf32, #tpu.memory_space<vmem>>, vector<1x8x1x16xf32>,
    %200 = vector.extract_strided_slice %175 {offsets = [0, 108], sizes = [8, 16], strides = [1, 1]} : vector<8x144xf32> to vector<8x16xf32>
    %c0_131 = arith.constant 0 : index
    %c0_132 = arith.constant 0 : index
    %c6_133 = arith.constant 6 : index
    %c0_134 = arith.constant 0 : index
    %201 = vector.load %arg6[%c0_131, %c0_132, %c6_133, %c0_134] : memref<1x8x8x16xf32, #tpu.memory_space<vmem>>, vector<1x8x1x16xf32>
    %202 = vector.shape_cast %201 : vector<1x8x1x16xf32> to vector<8x16xf32>
    %203 = vector.shape_cast %200 : vector<8x16xf32> to vector<1x8x1x16xf32>
    tpu.vector_store %arg6[%c0_131, %c0_132, %c6_133, %c0_134], %203 {strides = array<i32>} : memref<1x8x8x16xf32, #tpu.memory_space<vmem>>, vector<1x8x1x16xf32>,
    %204 = vector.extract_strided_slice %175 {offsets = [0, 126], sizes = [8, 16], strides = [1, 1]} : vector<8x144xf32> to vector<8x16xf32>
    %c0_135 = arith.constant 0 : index
    %c0_136 = arith.constant 0 : index
    %c7_137 = arith.constant 7 : index
    %c0_138 = arith.constant 0 : index
    %205 = vector.load %arg6[%c0_135, %c0_136, %c7_137, %c0_138] : memref<1x8x8x16xf32, #tpu.memory_space<vmem>>, vector<1x8x1x16xf32>
    %206 = vector.shape_cast %205 : vector<1x8x1x16xf32> to vector<8x16xf32>
    %207 = vector.shape_cast %204 : vector<8x16xf32> to vector<1x8x1x16xf32>
    tpu.vector_store %arg6[%c0_135, %c0_136, %c7_137, %c0_138], %207 {strides = array<i32>} : memref<1x8x8x16xf32, #tpu.memory_space<vmem>>, vector<1x8x1x16xf32>,
    return
  }
  func.func @transform_0(%arg0: i32, %arg1: i32) -> (i32, i32, i32, i32) {
    %c0_i32 = arith.constant 0 : i32
    %c0_i32_0 = arith.constant 0 : i32
    %c0_i32_1 = arith.constant 0 : i32
    return %arg0, %arg1, %c0_i32, %c0_i32_0 : i32, i32, i32, i32
  }
  func.func @transform_1(%arg0: i32, %arg1: i32) -> (i32, i32, i32, i32) {
    %c0_i32 = arith.constant 0 : i32
    %c0_i32_0 = arith.constant 0 : i32
    %c0_i32_1 = arith.constant 0 : i32
    return %arg0, %arg1, %c0_i32, %c0_i32_0 : i32, i32, i32, i32
  }
  func.func @transform_2(%arg0: i32, %arg1: i32) -> (i32, i32, i32) {
    %c0_i32 = arith.constant 0 : i32
    %c0_i32_0 = arith.constant 0 : i32
    %c0_i32_1 = arith.constant 0 : i32
    %c0_i32_2 = arith.constant 0 : i32
    return %c0_i32, %c0_i32_0, %c0_i32_1 : i32, i32, i32
  }
  func.func @transform_3(%arg0: i32, %arg1: i32) -> (i32, i32) {
    %c0_i32 = arith.constant 0 : i32
    %c0_i32_0 = arith.constant 0 : i32
    %c0_i32_1 = arith.constant 0 : i32
    return %c0_i32, %c0_i32_0 : i32, i32
  }
  func.func @transform_4(%arg0: i32, %arg1: i32) -> (i32, i32, i32, i32) {
    %c0_i32 = arith.constant 0 : i32
    %c0_i32_0 = arith.constant 0 : i32
    %c0_i32_1 = arith.constant 0 : i32
    return %arg0, %c0_i32, %arg1, %c0_i32_0 : i32, i32, i32, i32
  }
}

</mosaic_0001>

<llo_original>
// kernel: tpu_custom_call.1
$region0: #{tpu_custom_call.1}
  #allocation0 [shape = 'u32[]', space=smem, size = 0x4, offset = 0x4, fixed_abs, tag = 'smem constant byte address 0x4 - core index']
  #allocation1 [shape = 'u32[144,128]{1,0:T(1,128)}', space=vmem, size = 0x12000, scoped, tag = 'internal scratch']
  %s0 = inlined_call_operand.vmem [shape: bf16[2,2,4,182], index: 0, kind: input, shape index: {}]
  %s1 = inlined_call_operand.vmem [shape: bf16[2,2,1,182], index: 1, kind: input, shape index: {}]
  %s2 = inlined_call_operand.vmem [shape: bf16[9,8,4], index: 2, kind: input, shape index: {}]
  %s3 = inlined_call_operand.vmem [shape: f32[8,1], index: 3, kind: input, shape index: {}]
  %s4 = inlined_call_operand.hbm [shape: f32[2,8,16,16], index: 4, kind: output, shape index: {}]
  %s5 = sld [smem:[#allocation0]]
  $region49: #{tpu_custom_call.1} parent=0
    _
  %s7 = ssub.s32 1, %s5
  %s8 = scalar_select 0, %s7, %s5
  $region1: #{tpu_custom_call.1} parent=0
    #allocation2 [shape = 'u8[65536]{0}', space=vmem, size = 0x10000, scoped, tag = 'output window, operand 0']
    #allocation3 [shape = 's32[2]{0}', space=sflag, size = 0x8, scoped, tag = 'scoped memory for tpu_custom_call.1']
    %9 = vsyncpa [#allocation3], 0
    %s10 = scalar_lea.sflag [#allocation3], 1
    %11 = vsyncpa %s10, 0
    loop: start=0, step=1, limit=6
    $region2: #{tpu_custom_call.1} parent=1 // loop_pre_header
      _
    $region3: #{tpu_custom_call.1} parent=1 // loop_header
      %s13 = sphi 0, %s17
      %p14 = scmp.ge.s32.totalorder %s13, 6
      %s20 = sphi 0, %s32
      %s21 = sphi 0, %s28
      %s22 = sphi 0, %s20
      %s23 = sphi 0, %s21
      %s24 = sphi 0, %s22
      %s25 = sphi 0, %s23
      %s37 = sphi 0, %s39
      %s40 = sphi 0, %s37
      %s41 = sphi 0, %s40
      %s57 = sphi 0, %s41
      %s65 = sphi 0, %s67
      %s68 = sphi 0, %s65
      %s69 = sphi 0, %s68
      %s85 = sphi 0, %s69
      %s89 = sphi 0, %s89
      %s91 = sphi 0, %s89
      %s92 = sphi 0, %s91
      %s106 = sphi 0, %s92
      %s110 = sphi 0, %s110
      %s112 = sphi 0, %s110
      %s113 = sphi 0, %s112
      %s127 = sphi 0, %s113
      %s135 = sphi 0, %s137
      %s138 = sphi 0, %s135
      %s139 = sphi 0, %s138
      %s155 = sphi 0, %s139
    $region4: #{tpu_custom_call.1} parent=1 // loop_header_branch
      %16 = sbr.rel (%p14) target = $region8
    $region5: #{tpu_custom_call.1} parent=1 // loop_body
      %s18 = ssub.s32 %s13, 1
      %s19 = ssub.s32 %s13, 2
      %s26 = sadd.s32 1, %s21
      %p27 = scmp.ge.s32.totalorder %s26, 2
      %s28 = scalar_select %p27, 0, %s26
      %s29 = sadd.s32 1, %s20
      %s30 = scalar_select %p27, %s29, %s20
      %p31 = scmp.ge.s32.totalorder %s30, 2
      %s32 = scalar_select %p31, 0, %s30
      %s33 = ssub.s32 %s20, %s32
      %s34 = ssub.s32 %s21, %s28
      %s35 = sor.u32 %s33, %s34
      %p36 = scmp.eq.s32.totalorder %s35, 0
      %s38 = sadd.s32 %s37, 1
      %s39 = scalar_select %p36, %s37, %s38
      %p42 = pneg %p36
      %p43 = scmp.eq.s32.totalorder %s13, 3
      %p44 = por %p42, %p43
      %p45 = scmp.ne.s32.totalorder %s37, %s40
      %p46 = scmp.eq.s32.totalorder %s13, 0
      %p47 = por %p45, %p46
      %p48 = scmp.ne.s32.totalorder %s37, %s40
      %p49 = scmp.eq.s32.totalorder %s18, 3
      %p50 = por %p48, %p49
      %p51 = scmp.ne.s32.totalorder %s40, %s41
      %p52 = scmp.eq.s32.totalorder %s18, 0
      %p53 = por %p51, %p52
      %p54 = scmp.ne.s32.totalorder %s40, %s41
      %p55 = scmp.eq.s32.totalorder %s19, 3
      %p56 = por %p54, %p55
      %p58 = scmp.ne.s32.totalorder %s41, %s57
      %p59 = scmp.eq.s32.totalorder %s19, 0
      %p60 = por %p58, %p59
      %s61 = ssub.s32 %s20, %s32
      %s62 = ssub.s32 %s21, %s28
      %s63 = sor.u32 %s61, %s62
      %p64 = scmp.eq.s32.totalorder %s63, 0
      %s66 = sadd.s32 %s65, 1
      %s67 = scalar_select %p64, %s65, %s66
      %p70 = pneg %p64
      %p71 = scmp.eq.s32.totalorder %s13, 3
      %p72 = por %p70, %p71
      %p73 = scmp.ne.s32.totalorder %s65, %s68
      %p74 = scmp.eq.s32.totalorder %s13, 0
      %p75 = por %p73, %p74
      %p76 = scmp.ne.s32.totalorder %s65, %s68
      %p77 = scmp.eq.s32.totalorder %s18, 3
      %p78 = por %p76, %p77
      %p79 = scmp.ne.s32.totalorder %s68, %s69
      %p80 = scmp.eq.s32.totalorder %s18, 0
      %p81 = por %p79, %p80
      %p82 = scmp.ne.s32.totalorder %s68, %s69
      %p83 = scmp.eq.s32.totalorder %s19, 3
      %p84 = por %p82, %p83
      %p86 = scmp.ne.s32.totalorder %s69, %s85
      %p87 = scmp.eq.s32.totalorder %s19, 0
      %p88 = por %p86, %p87
      %s90 = sadd.s32 %s89, 1
      %p93 = scmp.eq.s32.totalorder %s13, 3
      %p94 = scmp.ne.s32.totalorder %s89, %s91
      %p95 = scmp.eq.s32.totalorder %s13, 0
      %p96 = por %p94, %p95
      %p97 = scmp.ne.s32.totalorder %s89, %s91
      %p98 = scmp.eq.s32.totalorder %s18, 3
      %p99 = por %p97, %p98
      %p100 = scmp.ne.s32.totalorder %s91, %s92
      %p101 = scmp.eq.s32.totalorder %s18, 0
      %p102 = por %p100, %p101
      %p103 = scmp.ne.s32.totalorder %s91, %s92
      %p104 = scmp.eq.s32.totalorder %s19, 3
      %p105 = por %p103, %p104
      %p107 = scmp.ne.s32.totalorder %s92, %s106
      %p108 = scmp.eq.s32.totalorder %s19, 0
      %p109 = por %p107, %p108
      %s111 = sadd.s32 %s110, 1
      %p114 = scmp.eq.s32.totalorder %s13, 3
      %p115 = scmp.ne.s32.totalorder %s110, %s112
      %p116 = scmp.eq.s32.totalorder %s13, 0
      %p117 = por %p115, %p116
      %p118 = scmp.ne.s32.totalorder %s110, %s112
      %p119 = scmp.eq.s32.totalorder %s18, 3
      %p120 = por %p118, %p119
      %p121 = scmp.ne.s32.totalorder %s112, %s113
      %p122 = scmp.eq.s32.totalorder %s18, 0
      %p123 = por %p121, %p122
      %p124 = scmp.ne.s32.totalorder %s112, %s113
      %p125 = scmp.eq.s32.totalorder %s19, 3
      %p126 = por %p124, %p125
      %p128 = scmp.ne.s32.totalorder %s113, %s127
      %p129 = scmp.eq.s32.totalorder %s19, 0
      %p130 = por %p128, %p129
      %s131 = ssub.s32 %s20, %s32
      %s132 = ssub.s32 %s21, %s28
      %s133 = sor.u32 %s131, %s132
      %p134 = scmp.eq.s32.totalorder %s133, 0
      %s136 = sadd.s32 %s135, 1
      %s137 = scalar_select %p134, %s135, %s136
      %p140 = pneg %p134
      %p141 = scmp.eq.s32.totalorder %s13, 3
      %p142 = por %p140, %p141
      %p143 = scmp.ne.s32.totalorder %s135, %s138
      %p144 = scmp.eq.s32.totalorder %s13, 0
      %p145 = por %p143, %p144
      %p146 = scmp.ne.s32.totalorder %s135, %s138
      %p147 = scmp.eq.s32.totalorder %s18, 3
      %p148 = por %p146, %p147
      %p149 = scmp.ne.s32.totalorder %s138, %s139
      %p150 = scmp.eq.s32.totalorder %s18, 0
      %p151 = por %p149, %p150
      %p152 = scmp.ne.s32.totalorder %s138, %s139
      %p153 = scmp.eq.s32.totalorder %s19, 3
      %p154 = por %p152, %p153
      %p156 = scmp.ne.s32.totalorder %s139, %s155
      %p157 = scmp.eq.s32.totalorder %s19, 0
      %p158 = por %p156, %p157
      %p159 = scmp.le.s32.totalorder 1, %s13
      %p160 = scmp.lt.s32.totalorder %s13, 5
      %p161 = pnand %p159, %p160
      %p162 = pneg %p161
      // Predicated region
      $region9: #{tpu_custom_call.1} parent=5 // pred_check
        _
      $region10: #{tpu_custom_call.1} parent=5 // pred_check_branch
        %164 = sbr.rel (%p161) target = $region12
      $region11: #{tpu_custom_call.1} parent=5 // pred_region
        %s165 = ssub.s32 %s13, 1
        // Predicated region
        $region13: #{tpu_custom_call.1} parent=11 // pred_check
          %p166 = pneg %p102
        $region14: #{tpu_custom_call.1} parent=11 // pred_check_branch
          %168 = sbr.rel (%p166) target = $region16
        $region15: #{tpu_custom_call.1} parent=11 // pred_region
          _
        $region16: #{tpu_custom_call.1} parent=11 // pred_fallthru
          _
        // Predicated region
        $region17: #{tpu_custom_call.1} parent=11 // pred_check
          %p169 = pneg %p123
        $region18: #{tpu_custom_call.1} parent=11 // pred_check_branch
          %171 = sbr.rel (%p169) target = $region20
        $region19: #{tpu_custom_call.1} parent=11 // pred_region
          _
        $region20: #{tpu_custom_call.1} parent=11 // pred_fallthru
          _
      $region12: #{tpu_custom_call.1} parent=5 // pred_fallthru
        _
      %p172 = scmp.lt.s32.totalorder %s13, 4
      // Predicated region
      $region21: #{tpu_custom_call.1} parent=5 // pred_check
        %p173 = pneg %p172
      $region22: #{tpu_custom_call.1} parent=5 // pred_check_branch
        %175 = sbr.rel (%p173) target = $region24
      $region23: #{tpu_custom_call.1} parent=5 // pred_region
        // Predicated region
        $region25: #{tpu_custom_call.1} parent=23 // pred_check
          %p176 = pneg %p47
        $region26: #{tpu_custom_call.1} parent=23 // pred_check_branch
          %178 = sbr.rel (%p176) target = $region28
        $region27: #{tpu_custom_call.1} parent=23 // pred_region
          %p179 = scmp.lt.s32.totalorder %s20, 1
          %s180 = scalar_select %p179, %s20, 1
          %p181 = scmp.lt.s32.totalorder %s21, 1
          %s182 = scalar_select %p181, %s21, 1
          %s183 = smul.addr %s182, 2
          %s184 = smul.addr %s180, 4
          %s185 = sadd.s32 %s183, %s184
          %s186 = smul.addr %s185, 2
          %s187 = scalar_lea.vmem %s0, %s186
        $region28: #{tpu_custom_call.1} parent=23 // pred_fallthru
          _
        // Predicated region
        $region29: #{tpu_custom_call.1} parent=23 // pred_check
          %p188 = pneg %p75
        $region30: #{tpu_custom_call.1} parent=23 // pred_check_branch
          %190 = sbr.rel (%p188) target = $region32
        $region31: #{tpu_custom_call.1} parent=23 // pred_region
          %p191 = scmp.lt.s32.totalorder %s20, 1
          %s192 = scalar_select %p191, %s20, 1
          %p193 = scmp.lt.s32.totalorder %s21, 1
          %s194 = scalar_select %p193, %s21, 1
          %s195 = smul.addr %s194, 2
          %s196 = smul.addr %s192, 4
          %s197 = sadd.s32 %s195, %s196
          %s198 = scalar_lea.vmem %s1, %s197
        $region32: #{tpu_custom_call.1} parent=23 // pred_fallthru
          _
      $region24: #{tpu_custom_call.1} parent=5 // pred_fallthru
        _
      %p199 = scmp.le.s32.totalorder 1, %s13
      %p200 = scmp.lt.s32.totalorder %s13, 5
      %p201 = pnand %p199, %p200
      %p202 = pneg %p201
      // Predicated region
      $region33: #{tpu_custom_call.1} parent=5 // pred_check
        _
      $region34: #{tpu_custom_call.1} parent=5 // pred_check_branch
        %204 = sbr.rel (%p201) target = $region36
      $region35: #{tpu_custom_call.1} parent=5 // pred_region
        %s205 = ssub.s32 %s13, 1
        %p206 = scmp.lt.s32.totalorder %s22, 1
        %s207 = scalar_select %p206, %s22, 1
        %p208 = scmp.lt.s32.totalorder %s23, 1
        %s209 = scalar_select %p208, %s23, 1
        %s210 = smul.addr %s209, 2
        %s211 = smul.addr %s207, 4
        %s212 = sadd.s32 %s210, %s211
        %s213 = smul.addr %s212, 2
        %s214 = scalar_lea.vmem %s0, %s213
        %p215 = pneg %p53
        %p216 = pneg %p50
        %p217 = scmp.lt.s32.totalorder %s22, 1
        %s218 = scalar_select %p217, %s22, 1
        %p219 = scmp.lt.s32.totalorder %s23, 1
        %s220 = scalar_select %p219, %s23, 1
        %s221 = smul.addr %s220, 2
        %s222 = smul.addr %s218, 4
        %s223 = sadd.s32 %s221, %s222
        %s224 = scalar_lea.vmem %s1, %s223
        %p225 = pneg %p81
        %p226 = pneg %p78
        %p227 = pneg %p102
        %p228 = pneg %p99
        %p229 = pneg %p123
        %p230 = pneg %p120
        %p231 = pneg %p151
        %p232 = pneg %p148
        %s233 = sand.u32 %s138, 1
        %s234 = scalar_lea.sflag [#allocation3], %s233
        %s235 = sand.u32 %s138, 1
        %s236 = smul.addr %s235, 64
        %s237 = scalar_lea.vmem [#allocation2], %s236
        %p238 = scmp.lt.s32.totalorder %s22, 1
        %s239 = scalar_select %p238, %s22, 1
        %p240 = scmp.lt.s32.totalorder %s23, 1
        %s241 = scalar_select %p240, %s23, 1
        %s242 = smul.addr %s241, 2
        %s243 = smul.addr %s239, 4
        %s244 = sadd.s32 %s242, %s243
        %s245 = smul.addr %s244, 2
        %s246 = scalar_lea.vmem %s0, %s245
        %p247 = scmp.lt.s32.totalorder %s22, 1
        %s248 = scalar_select %p247, %s22, 1
        %p249 = scmp.lt.s32.totalorder %s23, 1
        %s250 = scalar_select %p249, %s23, 1
        %s251 = smul.addr %s250, 2
        %s252 = smul.addr %s248, 4
        %s253 = sadd.s32 %s251, %s252
        %s254 = scalar_lea.vmem %s1, %s253
        %v256 = vld [vmem:[%s254] sm:$0x3]
        %v257 = vunpack.c.l.bf16 %v256
        %259 = vrot.lane.b32.xlu0 %v257, 109
        %v260 = vpop.permute.xlu0 %259
        %v261 = vrot.slane %v260, 2
        %vm262 = vcmask 891904
        %v263 = vsel %vm262, %v260, %v261
        %v265 = vsub.f32 %v257, %v263
        %v266 = vmul.f32 %v265, %v265
        %v267 = vsub.f32 0.0, %v266
        %v268 = vmul.f32 %v267, 1.442695
        %v269 = vpow.pop %v268
        %270 = vrot.lane.b32.xlu0 %v257, 110
        %v271 = vpop.permute.xlu0 %270
        %v272 = vrot.slane %v271, 2
        %vm273 = vcmask 900096
        %v274 = vsel %vm273, %v271, %v272
        %v276 = vsub.f32 %v257, %v274
        %v277 = vmul.f32 %v276, %v276
        %v278 = vsub.f32 0.0, %v277
        %v279 = vmul.f32 %v278, 1.442695
        %v280 = vpow.pop %v279
        %282 = vrot.lane.b32.xlu0 %v280, 127
        %v283 = vpop.permute.xlu0 %282
        %v284 = vrot.slane %v283, 2
        %vm285 = vcmask 1039360
        %v286 = vsel %vm285, %v283, %v284
        %v288 = vadd.f32 %v269, %v286
        %289 = vrot.lane.b32.xlu0 %v257, 111
        %v290 = vpop.permute.xlu0 %289
        %v291 = vrot.slane %v290, 2
        %vm292 = vcmask 908288
        %v293 = vsel %vm292, %v290, %v291
        %v295 = vsub.f32 %v257, %v293
        %v296 = vmul.f32 %v295, %v295
        %v297 = vsub.f32 0.0, %v296
        %v298 = vmul.f32 %v297, 1.442695
        %v299 = vpow.pop %v298
        %301 = vrot.lane.b32.xlu0 %v299, 126
        %v302 = vpop.permute.xlu0 %301
        %v303 = vrot.slane %v302, 2
        %vm304 = vcmask 1031168
        %v305 = vsel %vm304, %v302, %v303
        %v307 = vadd.f32 %v288, %v305
        %308 = vrot.lane.b32.xlu0 %v257, 127
        %v309 = vpop.permute.xlu0 %308
        %v310 = vrot.slane %v309, 2
        %v311 = vsel %vm285, %v309, %v310
        %v313 = vsub.f32 %v257, %v311
        %v314 = vmul.f32 %v313, %v313
        %v315 = vsub.f32 0.0, %v314
        %v316 = vmul.f32 %v315, 1.442695
        %v317 = vpow.pop %v316
        %319 = vrot.lane.b32.xlu0 %v317, 110
        %v320 = vpop.permute.xlu0 %319
        %v321 = vrot.slane %v320, 2
        %v322 = vsel %vm273, %v320, %v321
        %v324 = vadd.f32 %v307, %v322
        %v325 = vsub.f32 %v257, %v257
        %v326 = vmul.f32 %v325, %v325
        %v327 = vsub.f32 0.0, %v326
        %v328 = vmul.f32 %v327, 1.442695
        %v329 = vpow.pop %v328
        %331 = vrot.lane.b32.xlu0 %v329, 109
        %v332 = vpop.permute.xlu0 %331
        %v333 = vrot.slane %v332, 2
        %v334 = vsel %vm262, %v332, %v333
        %v336 = vadd.f32 %v324, %v334
        %337 = vrot.lane.b32.xlu0 %v257, 1
        %v338 = vpop.permute.xlu0 %337
        %v339 = vrot.slane %v338, 6
        %vm340 = vcmask 7168
        %v341 = vsel %vm340, %v339, %v338
        %v343 = vsub.f32 %v257, %v341
        %v344 = vmul.f32 %v343, %v343
        %v345 = vsub.f32 0.0, %v344
        %v346 = vmul.f32 %v345, 1.442695
        %v347 = vpow.pop %v346
        %349 = vrot.lane.b32.xlu0 %v347, 108
        %v350 = vpop.permute.xlu0 %349
        %v351 = vrot.slane %v350, 2
        %vm352 = vcmask 883712
        %v353 = vsel %vm352, %v350, %v351
        %v355 = vadd.f32 %v336, %v353
        %356 = vrot.lane.b32.xlu0 %v257, 17
        %v357 = vpop.permute.xlu0 %356
        %v358 = vrot.slane %v357, 6
        %vm359 = vcmask 138240
        %v360 = vsel %vm359, %v358, %v357
        %v362 = vsub.f32 %v257, %v360
        %v363 = vmul.f32 %v362, %v362
        %v364 = vsub.f32 0.0, %v363
        %v365 = vmul.f32 %v364, 1.442695
        %v366 = vpow.pop %v365
        %368 = vrot.lane.b32.xlu0 %v366, 92
        %v369 = vpop.permute.xlu0 %368
        %v370 = vrot.slane %v369, 2
        %vm371 = vcmask 752640
        %v372 = vsel %vm371, %v369, %v370
        %v374 = vadd.f32 %v355, %v372
        %375 = vrot.lane.b32.xlu0 %v257, 18
        %v376 = vpop.permute.xlu0 %375
        %v377 = vrot.slane %v376, 6
        %vm378 = vcmask 146432
        %v379 = vsel %vm378, %v377, %v376
        %v381 = vsub.f32 %v257, %v379
        %v382 = vmul.f32 %v381, %v381
        %v383 = vsub.f32 0.0, %v382
        %v384 = vmul.f32 %v383, 1.442695
        %v385 = vpow.pop %v384
        %387 = vrot.lane.b32.xlu0 %v385, 91
        %v388 = vpop.permute.xlu0 %387
        %v389 = vrot.slane %v388, 2
        %vm390 = vcmask 744448
        %v391 = vsel %vm390, %v388, %v389
        %v393 = vadd.f32 %v374, %v391
        %394 = vrot.lane.b32.xlu0 %v257, 19
        %v395 = vpop.permute.xlu0 %394
        %v396 = vrot.slane %v395, 6
        %vm397 = vcmask 154624
        %v398 = vsel %vm397, %v396, %v395
        %v400 = vsub.f32 %v257, %v398
        %v401 = vmul.f32 %v400, %v400
        %v402 = vsub.f32 0.0, %v401
        %v403 = vmul.f32 %v402, 1.442695
        %v404 = vpow.pop %v403
        %406 = vrot.lane.b32.xlu0 %v404, 90
        %v407 = vpop.permute.xlu0 %406
        %v408 = vrot.slane %v407, 2
        %vm409 = vcmask 736256
        %v410 = vsel %vm409, %v407, %v408
        %v412 = vadd.f32 %v393, %v410
        %v413 = vrcp.pop %v412
        %v414 = vmul.f32 %v269, %v413
        %v416 = vlaneseq
        %v417 = vshrl.u32 %v416, 7
        %v418 = vsub.s32 0, %v417
        %v419 = vrot.slane %v414, %v418
        %v420 = vlaneseq
        %v421 = vshrl.u32 %v420, 7
        %v422 = vsub.s32 2, %v421
        %v423 = vrot.slane %v414, %v422
        %v426 = vpack.c.bf16 %v419, %v419
        %v427 = vpack.c.bf16 %v423, %v423
        %v428 = vld [vmem:[%s246] sm:$0xf]
        %v430 = vpack.i.b16 %v426, %v426
        %v432 = vlaneseq
        %v433 = vshrl.u32 %v432, 7
        %v434 = vsub.s32 0, %v433
        %v435 = vrot.slane %v430, %v434
        %v437 = vpack.i.b16 %v427, %v427
        %v439 = vlaneseq
        %v440 = vshrl.u32 %v439, 7
        %v441 = vsub.s32 0, %v440
        %v442 = vrot.slane %v437, %v441
        %v445 = vcombine.low %v435, %v442
        %v447 = vunpack.c.l.s4 1983009808
        %v448 = vunpack.c.0.s8 %v447
        %v449 = vlaneseq
        %v450 = vshrl.u32 %v449, 7
        %v451 = vsub.s32 %v448, %v450
        %v452 = vrot.slane %v445, %v451
        %v454 = vmul.bf16 %v428, %v452
        %v455 = vld [vmem:[%s2] sm:$0xf]
        %457 = vrot.lane.b32.xlu0 %v413, 1
        %v458 = vpop.permute.xlu0 %457
        %v459 = vrot.slane %v458, 6
        %v460 = vsel %vm340, %v459, %v458
        %v462 = vmul.f32 %v280, %v460
        %v464 = vlaneseq
        %v465 = vshrl.u32 %v464, 7
        %v466 = vsub.s32 0, %v465
        %v467 = vrot.slane %v462, %v466
        %v468 = vlaneseq
        %v469 = vshrl.u32 %v468, 7
        %v470 = vsub.s32 2, %v469
        %v471 = vrot.slane %v462, %v470
        %v474 = vpack.c.bf16 %v467, %v467
        %v475 = vpack.c.bf16 %v471, %v471
        %v477 = vpack.i.b16 %v474, %v474
        %v479 = vlaneseq
        %v480 = vshrl.u32 %v479, 7
        %v481 = vsub.s32 0, %v480
        %v482 = vrot.slane %v477, %v481
        %v484 = vpack.i.b16 %v475, %v475
        %v486 = vlaneseq
        %v487 = vshrl.u32 %v486, 7
        %v488 = vsub.s32 0, %v487
        %v489 = vrot.slane %v484, %v488
        %v492 = vcombine.low %v482, %v489
        %v494 = vunpack.c.l.s4 1983009808
        %v495 = vunpack.c.0.s8 %v494
        %v496 = vlaneseq
        %v497 = vshrl.u32 %v496, 7
        %v498 = vsub.s32 %v495, %v497
        %v499 = vrot.slane %v492, %v498
        %v501 = vmul.bf16 %v428, %v499
        %s502 = scalar_lea.vmem %s2, 4
        %v503 = vld [vmem:[%s502] sm:$0xf]
        %v506 = vunpack.c.l.s4 1983009808
        %v507 = vunpack.c.0.s8 %v506
        %v508 = vlaneseq
        %v509 = vshrl.u32 %v508, 7
        %v510 = vsub.s32 %v507, %v509
        %v511 = vrot.slane %v501, %v510
        %v512 = vcombine.high %v511, %v511
        %513 = vrot.lane.b32.xlu0 %v511, 127
        %v514 = vpop.permute.xlu0 %513
        %515 = vrot.lane.b32.xlu0 %v512, 127
        %v516 = vpop.permute.xlu0 %515
        %vm517 = vcmask 1039360
        %v518 = vsel %vm517, %v514, %v516
        %vm519 = vcmask 31744
        %v521 = vsel %vm519, %v503, 0
        %vm523 = vcmask 1041408
        %v525 = vsel %vm523, %v518, 0
        %v528 = vsel %vm523, %v516, 0
        %530 = vmatprep.subr.bf16.mxu0 %v528
        %531 = vmatpush1.bf16.msra.mxu0 %v525
        %532 = vmatprep.subr.bf16.mxu0 0
        %533 = vmatpush1.bf16.msra.mxu0 0
        %534 = vmatprep.subr.bf16.mxu0 0
        %535 = vmatpush1.bf16.msra.mxu0 0
        %536 = vmatprep.subr.bf16.mxu0 0
        %537 = vmatpush1.bf16.msra.mxu0 0
        %538 = vmatprep.subr.bf16.mxu0 0
        %539 = vmatpush1.bf16.msra.mxu0 0
        %540 = vmatprep.subr.bf16.mxu0 0
        %541 = vmatpush1.bf16.msra.mxu0 0
        %542 = vmatprep.subr.bf16.mxu0 0
        %543 = vmatpush1.bf16.msra.mxu0 0
        %544 = vmatprep.subr.bf16.mxu0 0
        %545 = vmatpush1.bf16.msra.mxu0 0
        %546 = vmatprep.subr.bf16.mxu0 0
        %547 = vmatpush1.bf16.msra.mxu0 0
        %548 = vmatprep.subr.bf16.mxu0 0
        %549 = vmatpush1.bf16.msra.mxu0 0
        %550 = vmatprep.subr.bf16.mxu0 0
        %551 = vmatpush1.bf16.msra.mxu0 0
        %552 = vmatprep.subr.bf16.mxu0 0
        %553 = vmatpush1.bf16.msra.mxu0 0
        %554 = vmatprep.subr.bf16.mxu0 0
        %555 = vmatpush1.bf16.msra.mxu0 0
        %556 = vmatprep.subr.bf16.mxu0 0
        %557 = vmatpush1.bf16.msra.mxu0 0
        %558 = vmatprep.subr.bf16.mxu0 0
        %559 = vmatpush1.bf16.msra.mxu0 0
        %560 = vmatprep.subr.bf16.mxu0 0
        %561 = vmatpush1.bf16.msra.mxu0 0
        %562 = vmatprep.mubr.bf16.mxu0 0
        %563 = vmatmul.mubr.bf16.gmra.mrb[0].mxu0 %v521
        %v564 = vpop.f32.mrb[0].mxu0
        %v565 = vadd.f32 0.0, %v564
        %v566 = vpop.f32.mrb[0].mxu0
        %v567 = vadd.f32 0.0, %v566
        %v568 = vpop.f32.mrb[0].mxu0
        %v569 = vpop.f32.mrb[0].mxu0
        %570 = vdwg.mxu0
        %v573 = vunpack.c.l.s4 1983009808
        %v574 = vunpack.c.0.s8 %v573
        %v575 = vlaneseq
        %v576 = vshrl.u32 %v575, 7
        %v577 = vsub.s32 %v574, %v576
        %v578 = vrot.slane %v454, %v577
        %v579 = vcombine.high %v578, %v578
        %v581 = vsel %vm519, %v455, 0
        %v584 = vsel %vm523, %v578, 0
        %v587 = vsel %vm523, %v579, 0
        %589 = vmatprep.subr.bf16.mxu0 %v587
        %590 = vmatpush1.bf16.msra.mxu0 %v584
        %591 = vmatprep.subr.bf16.mxu0 0
        %592 = vmatpush1.bf16.msra.mxu0 0
        %593 = vmatprep.subr.bf16.mxu0 0
        %594 = vmatpush1.bf16.msra.mxu0 0
        %595 = vmatprep.subr.bf16.mxu0 0
        %596 = vmatpush1.bf16.msra.mxu0 0
        %597 = vmatprep.subr.bf16.mxu0 0
        %598 = vmatpush1.bf16.msra.mxu0 0
        %599 = vmatprep.subr.bf16.mxu0 0
        %600 = vmatpush1.bf16.msra.mxu0 0
        %601 = vmatprep.subr.bf16.mxu0 0
        %602 = vmatpush1.bf16.msra.mxu0 0
        %603 = vmatprep.subr.bf16.mxu0 0
        %604 = vmatpush1.bf16.msra.mxu0 0
        %605 = vmatprep.subr.bf16.mxu0 0
        %606 = vmatpush1.bf16.msra.mxu0 0
        %607 = vmatprep.subr.bf16.mxu0 0
        %608 = vmatpush1.bf16.msra.mxu0 0
        %609 = vmatprep.subr.bf16.mxu0 0
        %610 = vmatpush1.bf16.msra.mxu0 0
        %611 = vmatprep.subr.bf16.mxu0 0
        %612 = vmatpush1.bf16.msra.mxu0 0
        %613 = vmatprep.subr.bf16.mxu0 0
        %614 = vmatpush1.bf16.msra.mxu0 0
        %615 = vmatprep.subr.bf16.mxu0 0
        %616 = vmatpush1.bf16.msra.mxu0 0
        %617 = vmatprep.subr.bf16.mxu0 0
        %618 = vmatpush1.bf16.msra.mxu0 0
        %619 = vmatprep.subr.bf16.mxu0 0
        %620 = vmatpush1.bf16.msra.mxu0 0
        %621 = vmatprep.mubr.bf16.mxu0 0
        %622 = vmatmul.mubr.bf16.gmra.mrb[0].mxu0 %v581
        %v623 = vpop.f32.mrb[0].mxu0
        %v624 = vadd.f32 %v565, %v623
        %v625 = vpop.f32.mrb[0].mxu0
        %v626 = vadd.f32 %v567, %v625
        %v627 = vpop.f32.mrb[0].mxu0
        %v628 = vpop.f32.mrb[0].mxu0
        %629 = vdwg.mxu0
        %630 = vrot.lane.b32.xlu0 %v413, 2
        %v631 = vpop.permute.xlu0 %630
        %v632 = vrot.slane %v631, 6
        %vm633 = vcmask 15360
        %v634 = vsel %vm633, %v632, %v631
        %v636 = vmul.f32 %v299, %v634
        %v638 = vlaneseq
        %v639 = vshrl.u32 %v638, 7
        %v640 = vsub.s32 0, %v639
        %v641 = vrot.slane %v636, %v640
        %v642 = vlaneseq
        %v643 = vshrl.u32 %v642, 7
        %v644 = vsub.s32 2, %v643
        %v645 = vrot.slane %v636, %v644
        %v648 = vpack.c.bf16 %v641, %v641
        %v649 = vpack.c.bf16 %v645, %v645
        %v650 = vld [vmem:[%s246] sm:$0xf]
        %v652 = vpack.i.b16 %v648, %v648
        %v654 = vlaneseq
        %v655 = vshrl.u32 %v654, 7
        %v656 = vsub.s32 0, %v655
        %v657 = vrot.slane %v652, %v656
        %v659 = vpack.i.b16 %v649, %v649
        %v661 = vlaneseq
        %v662 = vshrl.u32 %v661, 7
        %v663 = vsub.s32 0, %v662
        %v664 = vrot.slane %v659, %v663
        %v667 = vcombine.low %v657, %v664
        %v669 = vunpack.c.l.s4 1983009808
        %v670 = vunpack.c.0.s8 %v669
        %v671 = vlaneseq
        %v672 = vshrl.u32 %v671, 7
        %v673 = vsub.s32 %v670, %v672
        %v674 = vrot.slane %v667, %v673
        %v676 = vmul.bf16 %v650, %v674
        %s677 = scalar_lea.vmem %s2, 8
        %v678 = vld [vmem:[%s677] sm:$0xf]
        %v681 = vunpack.c.l.s4 1983009808
        %v682 = vunpack.c.0.s8 %v681
        %v683 = vlaneseq
        %v684 = vshrl.u32 %v683, 7
        %v685 = vsub.s32 %v682, %v684
        %v686 = vrot.slane %v676, %v685
        %v687 = vcombine.high %v686, %v686
        %688 = vrot.lane.b32.xlu0 %v686, 126
        %v689 = vpop.permute.xlu0 %688
        %690 = vrot.lane.b32.xlu0 %v687, 126
        %v691 = vpop.permute.xlu0 %690
        %vm692 = vcmask 1031168
        %v693 = vsel %vm692, %v689, %v691
        %v695 = vsel %vm519, %v678, 0
        %v698 = vsel %vm523, %v693, 0
        %v701 = vsel %vm523, %v691, 0
        %703 = vmatprep.subr.bf16.mxu0 %v701
        %704 = vmatpush1.bf16.msra.mxu0 %v698
        %705 = vmatprep.subr.bf16.mxu0 0
        %706 = vmatpush1.bf16.msra.mxu0 0
        %707 = vmatprep.subr.bf16.mxu0 0
        %708 = vmatpush1.bf16.msra.mxu0 0
        %709 = vmatprep.subr.bf16.mxu0 0
        %710 = vmatpush1.bf16.msra.mxu0 0
        %711 = vmatprep.subr.bf16.mxu0 0
        %712 = vmatpush1.bf16.msra.mxu0 0
        %713 = vmatprep.subr.bf16.mxu0 0
        %714 = vmatpush1.bf16.msra.mxu0 0
        %715 = vmatprep.subr.bf16.mxu0 0
        %716 = vmatpush1.bf16.msra.mxu0 0
        %717 = vmatprep.subr.bf16.mxu0 0
        %718 = vmatpush1.bf16.msra.mxu0 0
        %719 = vmatprep.subr.bf16.mxu0 0
        %720 = vmatpush1.bf16.msra.mxu0 0
        %721 = vmatprep.subr.bf16.mxu0 0
        %722 = vmatpush1.bf16.msra.mxu0 0
        %723 = vmatprep.subr.bf16.mxu0 0
        %724 = vmatpush1.bf16.msra.mxu0 0
        %725 = vmatprep.subr.bf16.mxu0 0
        %726 = vmatpush1.bf16.msra.mxu0 0
        %727 = vmatprep.subr.bf16.mxu0 0
        %728 = vmatpush1.bf16.msra.mxu0 0
        %729 = vmatprep.subr.bf16.mxu0 0
        %730 = vmatpush1.bf16.msra.mxu0 0
        %731 = vmatprep.subr.bf16.mxu0 0
        %732 = vmatpush1.bf16.msra.mxu0 0
        %733 = vmatprep.subr.bf16.mxu0 0
        %734 = vmatpush1.bf16.msra.mxu0 0
        %735 = vmatprep.mubr.bf16.mxu0 0
        %736 = vmatmul.mubr.bf16.gmra.mrb[0].mxu0 %v695
        %v737 = vpop.f32.mrb[0].mxu0
        %v738 = vadd.f32 0.0, %v737
        %v739 = vpop.f32.mrb[0].mxu0
        %v740 = vadd.f32 0.0, %v739
        %v741 = vpop.f32.mrb[0].mxu0
        %v742 = vpop.f32.mrb[0].mxu0
        %743 = vdwg.mxu0
        %v744 = vadd.f32 %v624, %v738
        %v745 = vadd.f32 %v626, %v740
        %746 = vrot.lane.b32.xlu0 %v413, 18
        %v747 = vpop.permute.xlu0 %746
        %v748 = vrot.slane %v747, 6
        %v749 = vsel %vm378, %v748, %v747
        %v751 = vmul.f32 %v317, %v749
        %v753 = vlaneseq
        %v754 = vshrl.u32 %v753, 7
        %v755 = vsub.s32 0, %v754
        %v756 = vrot.slane %v751, %v755
        %v757 = vlaneseq
        %v758 = vshrl.u32 %v757, 7
        %v759 = vsub.s32 2, %v758
        %v760 = vrot.slane %v751, %v759
        %v763 = vpack.c.bf16 %v756, %v756
        %v764 = vpack.c.bf16 %v760, %v760
        %v765 = vld [vmem:[%s246] sm:$0xf]
        %v767 = vpack.i.b16 %v763, %v763
        %v769 = vlaneseq
        %v770 = vshrl.u32 %v769, 7
        %v771 = vsub.s32 0, %v770
        %v772 = vrot.slane %v767, %v771
        %v774 = vpack.i.b16 %v764, %v764
        %v776 = vlaneseq
        %v777 = vshrl.u32 %v776, 7
        %v778 = vsub.s32 0, %v777
        %v779 = vrot.slane %v774, %v778
        %v782 = vcombine.low %v772, %v779
        %v784 = vunpack.c.l.s4 1983009808
        %v785 = vunpack.c.0.s8 %v784
        %v786 = vlaneseq
        %v787 = vshrl.u32 %v786, 7
        %v788 = vsub.s32 %v785, %v787
        %v789 = vrot.slane %v782, %v788
        %v791 = vmul.bf16 %v765, %v789
        %s792 = scalar_lea.vmem %s2, 12
        %v793 = vld [vmem:[%s792] sm:$0xf]
        %v796 = vunpack.c.l.s4 1983009808
        %v797 = vunpack.c.0.s8 %v796
        %v798 = vlaneseq
        %v799 = vshrl.u32 %v798, 7
        %v800 = vsub.s32 %v797, %v799
        %v801 = vrot.slane %v791, %v800
        %v802 = vcombine.high %v801, %v801
        %803 = vrot.lane.b32.xlu0 %v801, 110
        %v804 = vpop.permute.xlu0 %803
        %805 = vrot.lane.b32.xlu0 %v802, 110
        %v806 = vpop.permute.xlu0 %805
        %vm807 = vcmask 900096
        %v808 = vsel %vm807, %v804, %v806
        %v810 = vsel %vm519, %v793, 0
        %v813 = vsel %vm523, %v808, 0
        %v816 = vsel %vm523, %v806, 0
        %818 = vmatprep.subr.bf16.mxu0 %v816
        %819 = vmatpush1.bf16.msra.mxu0 %v813
        %820 = vmatprep.subr.bf16.mxu0 0
        %821 = vmatpush1.bf16.msra.mxu0 0
        %822 = vmatprep.subr.bf16.mxu0 0
        %823 = vmatpush1.bf16.msra.mxu0 0
        %824 = vmatprep.subr.bf16.mxu0 0
        %825 = vmatpush1.bf16.msra.mxu0 0
        %826 = vmatprep.subr.bf16.mxu0 0
        %827 = vmatpush1.bf16.msra.mxu0 0
        %828 = vmatprep.subr.bf16.mxu0 0
        %829 = vmatpush1.bf16.msra.mxu0 0
        %830 = vmatprep.subr.bf16.mxu0 0
        %831 = vmatpush1.bf16.msra.mxu0 0
        %832 = vmatprep.subr.bf16.mxu0 0
        %833 = vmatpush1.bf16.msra.mxu0 0
        %834 = vmatprep.subr.bf16.mxu0 0
        %835 = vmatpush1.bf16.msra.mxu0 0
        %836 = vmatprep.subr.bf16.mxu0 0
        %837 = vmatpush1.bf16.msra.mxu0 0
        %838 = vmatprep.subr.bf16.mxu0 0
        %839 = vmatpush1.bf16.msra.mxu0 0
        %840 = vmatprep.subr.bf16.mxu0 0
        %841 = vmatpush1.bf16.msra.mxu0 0
        %842 = vmatprep.subr.bf16.mxu0 0
        %843 = vmatpush1.bf16.msra.mxu0 0
        %844 = vmatprep.subr.bf16.mxu0 0
        %845 = vmatpush1.bf16.msra.mxu0 0
        %846 = vmatprep.subr.bf16.mxu0 0
        %847 = vmatpush1.bf16.msra.mxu0 0
        %848 = vmatprep.subr.bf16.mxu0 0
        %849 = vmatpush1.bf16.msra.mxu0 0
        %850 = vmatprep.mubr.bf16.mxu0 0
        %851 = vmatmul.mubr.bf16.gmra.mrb[0].mxu0 %v810
        %v852 = vpop.f32.mrb[0].mxu0
        %v853 = vadd.f32 0.0, %v852
        %v854 = vpop.f32.mrb[0].mxu0
        %v855 = vadd.f32 0.0, %v854
        %v856 = vpop.f32.mrb[0].mxu0
        %v857 = vpop.f32.mrb[0].mxu0
        %858 = vdwg.mxu0
        %v859 = vadd.f32 %v744, %v853
        %v860 = vadd.f32 %v745, %v855
        %861 = vrot.lane.b32.xlu0 %v413, 19
        %v862 = vpop.permute.xlu0 %861
        %v863 = vrot.slane %v862, 6
        %v864 = vsel %vm397, %v863, %v862
        %v866 = vmul.f32 %v329, %v864
        %v868 = vlaneseq
        %v869 = vshrl.u32 %v868, 7
        %v870 = vsub.s32 0, %v869
        %v871 = vrot.slane %v866, %v870
        %v872 = vlaneseq
        %v873 = vshrl.u32 %v872, 7
        %v874 = vsub.s32 2, %v873
        %v875 = vrot.slane %v866, %v874
        %v878 = vpack.c.bf16 %v871, %v871
        %v879 = vpack.c.bf16 %v875, %v875
        %v880 = vld [vmem:[%s246] sm:$0xf]
        %v882 = vpack.i.b16 %v878, %v878
        %v884 = vlaneseq
        %v885 = vshrl.u32 %v884, 7
        %v886 = vsub.s32 0, %v885
        %v887 = vrot.slane %v882, %v886
        %v889 = vpack.i.b16 %v879, %v879
        %v891 = vlaneseq
        %v892 = vshrl.u32 %v891, 7
        %v893 = vsub.s32 0, %v892
        %v894 = vrot.slane %v889, %v893
        %v897 = vcombine.low %v887, %v894
        %v899 = vunpack.c.l.s4 1983009808
        %v900 = vunpack.c.0.s8 %v899
        %v901 = vlaneseq
        %v902 = vshrl.u32 %v901, 7
        %v903 = vsub.s32 %v900, %v902
        %v904 = vrot.slane %v897, %v903
        %v906 = vmul.bf16 %v880, %v904
        %s907 = scalar_lea.vmem %s2, 16
        %v908 = vld [vmem:[%s907] sm:$0xf]
        %v911 = vunpack.c.l.s4 1983009808
        %v912 = vunpack.c.0.s8 %v911
        %v913 = vlaneseq
        %v914 = vshrl.u32 %v913, 7
        %v915 = vsub.s32 %v912, %v914
        %v916 = vrot.slane %v906, %v915
        %v917 = vcombine.high %v916, %v916
        %918 = vrot.lane.b32.xlu0 %v916, 109
        %v919 = vpop.permute.xlu0 %918
        %920 = vrot.lane.b32.xlu0 %v917, 109
        %v921 = vpop.permute.xlu0 %920
        %vm922 = vcmask 891904
        %v923 = vsel %vm922, %v919, %v921
        %v925 = vsel %vm519, %v908, 0
        %v928 = vsel %vm523, %v923, 0
        %v931 = vsel %vm523, %v921, 0
        %933 = vmatprep.subr.bf16.mxu0 %v931
        %934 = vmatpush1.bf16.msra.mxu0 %v928
        %935 = vmatprep.subr.bf16.mxu0 0
        %936 = vmatpush1.bf16.msra.mxu0 0
        %937 = vmatprep.subr.bf16.mxu0 0
        %938 = vmatpush1.bf16.msra.mxu0 0
        %939 = vmatprep.subr.bf16.mxu0 0
        %940 = vmatpush1.bf16.msra.mxu0 0
        %941 = vmatprep.subr.bf16.mxu0 0
        %942 = vmatpush1.bf16.msra.mxu0 0
        %943 = vmatprep.subr.bf16.mxu0 0
        %944 = vmatpush1.bf16.msra.mxu0 0
        %945 = vmatprep.subr.bf16.mxu0 0
        %946 = vmatpush1.bf16.msra.mxu0 0
        %947 = vmatprep.subr.bf16.mxu0 0
        %948 = vmatpush1.bf16.msra.mxu0 0
        %949 = vmatprep.subr.bf16.mxu0 0
        %950 = vmatpush1.bf16.msra.mxu0 0
        %951 = vmatprep.subr.bf16.mxu0 0
        %952 = vmatpush1.bf16.msra.mxu0 0
        %953 = vmatprep.subr.bf16.mxu0 0
        %954 = vmatpush1.bf16.msra.mxu0 0
        %955 = vmatprep.subr.bf16.mxu0 0
        %956 = vmatpush1.bf16.msra.mxu0 0
        %957 = vmatprep.subr.bf16.mxu0 0
        %958 = vmatpush1.bf16.msra.mxu0 0
        %959 = vmatprep.subr.bf16.mxu0 0
        %960 = vmatpush1.bf16.msra.mxu0 0
        %961 = vmatprep.subr.bf16.mxu0 0
        %962 = vmatpush1.bf16.msra.mxu0 0
        %963 = vmatprep.subr.bf16.mxu0 0
        %964 = vmatpush1.bf16.msra.mxu0 0
        %965 = vmatprep.mubr.bf16.mxu0 0
        %966 = vmatmul.mubr.bf16.gmra.mrb[0].mxu0 %v925
        %v967 = vpop.f32.mrb[0].mxu0
        %v968 = vadd.f32 0.0, %v967
        %v969 = vpop.f32.mrb[0].mxu0
        %v970 = vadd.f32 0.0, %v969
        %v971 = vpop.f32.mrb[0].mxu0
        %v972 = vpop.f32.mrb[0].mxu0
        %973 = vdwg.mxu0
        %v974 = vadd.f32 %v859, %v968
        %v975 = vadd.f32 %v860, %v970
        %976 = vrot.lane.b32.xlu0 %v413, 20
        %v977 = vpop.permute.xlu0 %976
        %v978 = vrot.slane %v977, 6
        %vm979 = vcmask 162816
        %v980 = vsel %vm979, %v978, %v977
        %v982 = vmul.f32 %v347, %v980
        %v984 = vlaneseq
        %v985 = vshrl.u32 %v984, 7
        %v986 = vsub.s32 0, %v985
        %v987 = vrot.slane %v982, %v986
        %v988 = vlaneseq
        %v989 = vshrl.u32 %v988, 7
        %v990 = vsub.s32 2, %v989
        %v991 = vrot.slane %v982, %v990
        %v994 = vpack.c.bf16 %v987, %v987
        %v995 = vpack.c.bf16 %v991, %v991
        %v996 = vld [vmem:[%s246] sm:$0xf]
        %v998 = vpack.i.b16 %v994, %v994
        %v1000 = vlaneseq
        %v1001 = vshrl.u32 %v1000, 7
        %v1002 = vsub.s32 0, %v1001
        %v1003 = vrot.slane %v998, %v1002
        %v1005 = vpack.i.b16 %v995, %v995
        %v1007 = vlaneseq
        %v1008 = vshrl.u32 %v1007, 7
        %v1009 = vsub.s32 0, %v1008
        %v1010 = vrot.slane %v1005, %v1009
        %v1013 = vcombine.low %v1003, %v1010
        %v1015 = vunpack.c.l.s4 1983009808
        %v1016 = vunpack.c.0.s8 %v1015
        %v1017 = vlaneseq
        %v1018 = vshrl.u32 %v1017, 7
        %v1019 = vsub.s32 %v1016, %v1018
        %v1020 = vrot.slane %v1013, %v1019
        %v1022 = vmul.bf16 %v996, %v1020
        %s1023 = scalar_lea.vmem %s2, 20
        %v1024 = vld [vmem:[%s1023] sm:$0xf]
        %v1027 = vunpack.c.l.s4 1983009808
        %v1028 = vunpack.c.0.s8 %v1027
        %v1029 = vlaneseq
        %v1030 = vshrl.u32 %v1029, 7
        %v1031 = vsub.s32 %v1028, %v1030
        %v1032 = vrot.slane %v1022, %v1031
        %v1033 = vcombine.high %v1032, %v1032
        %1034 = vrot.lane.b32.xlu0 %v1032, 108
        %v1035 = vpop.permute.xlu0 %1034
        %1036 = vrot.lane.b32.xlu0 %v1033, 108
        %v1037 = vpop.permute.xlu0 %1036
        %vm1038 = vcmask 883712
        %v1039 = vsel %vm1038, %v1035, %v1037
        %v1041 = vsel %vm519, %v1024, 0
        %v1044 = vsel %vm523, %v1039, 0
        %v1047 = vsel %vm523, %v1037, 0
        %1049 = vmatprep.subr.bf16.mxu0 %v1047
        %1050 = vmatpush1.bf16.msra.mxu0 %v1044
        %1051 = vmatprep.subr.bf16.mxu0 0
        %1052 = vmatpush1.bf16.msra.mxu0 0
        %1053 = vmatprep.subr.bf16.mxu0 0
        %1054 = vmatpush1.bf16.msra.mxu0 0
        %1055 = vmatprep.subr.bf16.mxu0 0
        %1056 = vmatpush1.bf16.msra.mxu0 0
        %1057 = vmatprep.subr.bf16.mxu0 0
        %1058 = vmatpush1.bf16.msra.mxu0 0
        %1059 = vmatprep.subr.bf16.mxu0 0
        %1060 = vmatpush1.bf16.msra.mxu0 0
        %1061 = vmatprep.subr.bf16.mxu0 0
        %1062 = vmatpush1.bf16.msra.mxu0 0
        %1063 = vmatprep.subr.bf16.mxu0 0
        %1064 = vmatpush1.bf16.msra.mxu0 0
        %1065 = vmatprep.subr.bf16.mxu0 0
        %1066 = vmatpush1.bf16.msra.mxu0 0
        %1067 = vmatprep.subr.bf16.mxu0 0
        %1068 = vmatpush1.bf16.msra.mxu0 0
        %1069 = vmatprep.subr.bf16.mxu0 0
        %1070 = vmatpush1.bf16.msra.mxu0 0
        %1071 = vmatprep.subr.bf16.mxu0 0
        %1072 = vmatpush1.bf16.msra.mxu0 0
        %1073 = vmatprep.subr.bf16.mxu0 0
        %1074 = vmatpush1.bf16.msra.mxu0 0
        %1075 = vmatprep.subr.bf16.mxu0 0
        %1076 = vmatpush1.bf16.msra.mxu0 0
        %1077 = vmatprep.subr.bf16.mxu0 0
        %1078 = vmatpush1.bf16.msra.mxu0 0
        %1079 = vmatprep.subr.bf16.mxu0 0
        %1080 = vmatpush1.bf16.msra.mxu0 0
        %1081 = vmatprep.mubr.bf16.mxu0 0
        %1082 = vmatmul.mubr.bf16.gmra.mrb[0].mxu0 %v1041
        %v1083 = vpop.f32.mrb[0].mxu0
        %v1084 = vadd.f32 0.0, %v1083
        %v1085 = vpop.f32.mrb[0].mxu0
        %v1086 = vadd.f32 0.0, %v1085
        %v1087 = vpop.f32.mrb[0].mxu0
        %v1088 = vpop.f32.mrb[0].mxu0
        %1089 = vdwg.mxu0
        %v1090 = vadd.f32 %v974, %v1084
        %v1091 = vadd.f32 %v975, %v1086
        %1092 = vrot.lane.b32.xlu0 %v413, 36
        %v1093 = vpop.permute.xlu0 %1092
        %v1094 = vrot.slane %v1093, 6
        %vm1095 = vcmask 293888
        %v1096 = vsel %vm1095, %v1094, %v1093
        %v1098 = vmul.f32 %v366, %v1096
        %v1100 = vlaneseq
        %v1101 = vshrl.u32 %v1100, 7
        %v1102 = vsub.s32 0, %v1101
        %v1103 = vrot.slane %v1098, %v1102
        %v1104 = vlaneseq
        %v1105 = vshrl.u32 %v1104, 7
        %v1106 = vsub.s32 2, %v1105
        %v1107 = vrot.slane %v1098, %v1106
        %v1110 = vpack.c.bf16 %v1103, %v1103
        %v1111 = vpack.c.bf16 %v1107, %v1107
        %v1112 = vld [vmem:[%s246] sm:$0xf]
        %v1114 = vpack.i.b16 %v1110, %v1110
        %v1116 = vlaneseq
        %v1117 = vshrl.u32 %v1116, 7
        %v1118 = vsub.s32 0, %v1117
        %v1119 = vrot.slane %v1114, %v1118
        %v1121 = vpack.i.b16 %v1111, %v1111
        %v1123 = vlaneseq
        %v1124 = vshrl.u32 %v1123, 7
        %v1125 = vsub.s32 0, %v1124
        %v1126 = vrot.slane %v1121, %v1125
        %v1129 = vcombine.low %v1119, %v1126
        %v1131 = vunpack.c.l.s4 1983009808
        %v1132 = vunpack.c.0.s8 %v1131
        %v1133 = vlaneseq
        %v1134 = vshrl.u32 %v1133, 7
        %v1135 = vsub.s32 %v1132, %v1134
        %v1136 = vrot.slane %v1129, %v1135
        %v1138 = vmul.bf16 %v1112, %v1136
        %s1139 = scalar_lea.vmem %s2, 24
        %v1140 = vld [vmem:[%s1139] sm:$0xf]
        %v1143 = vunpack.c.l.s4 1983009808
        %v1144 = vunpack.c.0.s8 %v1143
        %v1145 = vlaneseq
        %v1146 = vshrl.u32 %v1145, 7
        %v1147 = vsub.s32 %v1144, %v1146
        %v1148 = vrot.slane %v1138, %v1147
        %v1149 = vcombine.high %v1148, %v1148
        %1150 = vrot.lane.b32.xlu0 %v1148, 92
        %v1151 = vpop.permute.xlu0 %1150
        %1152 = vrot.lane.b32.xlu0 %v1149, 92
        %v1153 = vpop.permute.xlu0 %1152
        %vm1154 = vcmask 752640
        %v1155 = vsel %vm1154, %v1151, %v1153
        %v1157 = vsel %vm519, %v1140, 0
        %v1160 = vsel %vm523, %v1155, 0
        %v1163 = vsel %vm523, %v1153, 0
        %1165 = vmatprep.subr.bf16.mxu0 %v1163
        %1166 = vmatpush1.bf16.msra.mxu0 %v1160
        %1167 = vmatprep.subr.bf16.mxu0 0
        %1168 = vmatpush1.bf16.msra.mxu0 0
        %1169 = vmatprep.subr.bf16.mxu0 0
        %1170 = vmatpush1.bf16.msra.mxu0 0
        %1171 = vmatprep.subr.bf16.mxu0 0
        %1172 = vmatpush1.bf16.msra.mxu0 0
        %1173 = vmatprep.subr.bf16.mxu0 0
        %1174 = vmatpush1.bf16.msra.mxu0 0
        %1175 = vmatprep.subr.bf16.mxu0 0
        %1176 = vmatpush1.bf16.msra.mxu0 0
        %1177 = vmatprep.subr.bf16.mxu0 0
        %1178 = vmatpush1.bf16.msra.mxu0 0
        %1179 = vmatprep.subr.bf16.mxu0 0
        %1180 = vmatpush1.bf16.msra.mxu0 0
        %1181 = vmatprep.subr.bf16.mxu0 0
        %1182 = vmatpush1.bf16.msra.mxu0 0
        %1183 = vmatprep.subr.bf16.mxu0 0
        %1184 = vmatpush1.bf16.msra.mxu0 0
        %1185 = vmatprep.subr.bf16.mxu0 0
        %1186 = vmatpush1.bf16.msra.mxu0 0
        %1187 = vmatprep.subr.bf16.mxu0 0
        %1188 = vmatpush1.bf16.msra.mxu0 0
        %1189 = vmatprep.subr.bf16.mxu0 0
        %1190 = vmatpush1.bf16.msra.mxu0 0
        %1191 = vmatprep.subr.bf16.mxu0 0
        %1192 = vmatpush1.bf16.msra.mxu0 0
        %1193 = vmatprep.subr.bf16.mxu0 0
        %1194 = vmatpush1.bf16.msra.mxu0 0
        %1195 = vmatprep.subr.bf16.mxu0 0
        %1196 = vmatpush1.bf16.msra.mxu0 0
        %1197 = vmatprep.mubr.bf16.mxu0 0
        %1198 = vmatmul.mubr.bf16.gmra.mrb[0].mxu0 %v1157
        %v1199 = vpop.f32.mrb[0].mxu0
        %v1200 = vadd.f32 0.0, %v1199
        %v1201 = vpop.f32.mrb[0].mxu0
        %v1202 = vadd.f32 0.0, %v1201
        %v1203 = vpop.f32.mrb[0].mxu0
        %v1204 = vpop.f32.mrb[0].mxu0
        %1205 = vdwg.mxu0
        %v1206 = vadd.f32 %v1090, %v1200
        %v1207 = vadd.f32 %v1091, %v1202
        %1208 = vrot.lane.b32.xlu0 %v413, 37
        %v1209 = vpop.permute.xlu0 %1208
        %v1210 = vrot.slane %v1209, 6
        %vm1211 = vcmask 302080
        %v1212 = vsel %vm1211, %v1210, %v1209
        %v1214 = vmul.f32 %v385, %v1212
        %v1216 = vlaneseq
        %v1217 = vshrl.u32 %v1216, 7
        %v1218 = vsub.s32 0, %v1217
        %v1219 = vrot.slane %v1214, %v1218
        %v1220 = vlaneseq
        %v1221 = vshrl.u32 %v1220, 7
        %v1222 = vsub.s32 2, %v1221
        %v1223 = vrot.slane %v1214, %v1222
        %v1226 = vpack.c.bf16 %v1219, %v1219
        %v1227 = vpack.c.bf16 %v1223, %v1223
        %v1228 = vld [vmem:[%s246] sm:$0xf]
        %v1230 = vpack.i.b16 %v1226, %v1226
        %v1232 = vlaneseq
        %v1233 = vshrl.u32 %v1232, 7
        %v1234 = vsub.s32 0, %v1233
        %v1235 = vrot.slane %v1230, %v1234
        %v1237 = vpack.i.b16 %v1227, %v1227
        %v1239 = vlaneseq
        %v1240 = vshrl.u32 %v1239, 7
        %v1241 = vsub.s32 0, %v1240
        %v1242 = vrot.slane %v1237, %v1241
        %v1245 = vcombine.low %v1235, %v1242
        %v1247 = vunpack.c.l.s4 1983009808
        %v1248 = vunpack.c.0.s8 %v1247
        %v1249 = vlaneseq
        %v1250 = vshrl.u32 %v1249, 7
        %v1251 = vsub.s32 %v1248, %v1250
        %v1252 = vrot.slane %v1245, %v1251
        %v1254 = vmul.bf16 %v1228, %v1252
        %s1255 = scalar_lea.vmem %s2, 28
        %v1256 = vld [vmem:[%s1255] sm:$0xf]
        %v1259 = vunpack.c.l.s4 1983009808
        %v1260 = vunpack.c.0.s8 %v1259
        %v1261 = vlaneseq
        %v1262 = vshrl.u32 %v1261, 7
        %v1263 = vsub.s32 %v1260, %v1262
        %v1264 = vrot.slane %v1254, %v1263
        %v1265 = vcombine.high %v1264, %v1264
        %1266 = vrot.lane.b32.xlu0 %v1264, 91
        %v1267 = vpop.permute.xlu0 %1266
        %1268 = vrot.lane.b32.xlu0 %v1265, 91
        %v1269 = vpop.permute.xlu0 %1268
        %vm1270 = vcmask 744448
        %v1271 = vsel %vm1270, %v1267, %v1269
        %v1273 = vsel %vm519, %v1256, 0
        %v1276 = vsel %vm523, %v1271, 0
        %v1279 = vsel %vm523, %v1269, 0
        %1281 = vmatprep.subr.bf16.mxu0 %v1279
        %1282 = vmatpush1.bf16.msra.mxu0 %v1276
        %1283 = vmatprep.subr.bf16.mxu0 0
        %1284 = vmatpush1.bf16.msra.mxu0 0
        %1285 = vmatprep.subr.bf16.mxu0 0
        %1286 = vmatpush1.bf16.msra.mxu0 0
        %1287 = vmatprep.subr.bf16.mxu0 0
        %1288 = vmatpush1.bf16.msra.mxu0 0
        %1289 = vmatprep.subr.bf16.mxu0 0
        %1290 = vmatpush1.bf16.msra.mxu0 0
        %1291 = vmatprep.subr.bf16.mxu0 0
        %1292 = vmatpush1.bf16.msra.mxu0 0
        %1293 = vmatprep.subr.bf16.mxu0 0
        %1294 = vmatpush1.bf16.msra.mxu0 0
        %1295 = vmatprep.subr.bf16.mxu0 0
        %1296 = vmatpush1.bf16.msra.mxu0 0
        %1297 = vmatprep.subr.bf16.mxu0 0
        %1298 = vmatpush1.bf16.msra.mxu0 0
        %1299 = vmatprep.subr.bf16.mxu0 0
        %1300 = vmatpush1.bf16.msra.mxu0 0
        %1301 = vmatprep.subr.bf16.mxu0 0
        %1302 = vmatpush1.bf16.msra.mxu0 0
        %1303 = vmatprep.subr.bf16.mxu0 0
        %1304 = vmatpush1.bf16.msra.mxu0 0
        %1305 = vmatprep.subr.bf16.mxu0 0
        %1306 = vmatpush1.bf16.msra.mxu0 0
        %1307 = vmatprep.subr.bf16.mxu0 0
        %1308 = vmatpush1.bf16.msra.mxu0 0
        %1309 = vmatprep.subr.bf16.mxu0 0
        %1310 = vmatpush1.bf16.msra.mxu0 0
        %1311 = vmatprep.subr.bf16.mxu0 0
        %1312 = vmatpush1.bf16.msra.mxu0 0
        %1313 = vmatprep.mubr.bf16.mxu0 0
        %1314 = vmatmul.mubr.bf16.gmra.mrb[0].mxu0 %v1273
        %v1315 = vpop.f32.mrb[0].mxu0
        %v1316 = vadd.f32 0.0, %v1315
        %v1317 = vpop.f32.mrb[0].mxu0
        %v1318 = vadd.f32 0.0, %v1317
        %v1319 = vpop.f32.mrb[0].mxu0
        %v1320 = vpop.f32.mrb[0].mxu0
        %1321 = vdwg.mxu0
        %v1322 = vadd.f32 %v1206, %v1316
        %v1323 = vadd.f32 %v1207, %v1318
        %1324 = vrot.lane.b32.xlu0 %v413, 38
        %v1325 = vpop.permute.xlu0 %1324
        %v1326 = vrot.slane %v1325, 6
        %vm1327 = vcmask 310272
        %v1328 = vsel %vm1327, %v1326, %v1325
        %v1330 = vmul.f32 %v404, %v1328
        %v1332 = vlaneseq
        %v1333 = vshrl.u32 %v1332, 7
        %v1334 = vsub.s32 0, %v1333
        %v1335 = vrot.slane %v1330, %v1334
        %v1336 = vlaneseq
        %v1337 = vshrl.u32 %v1336, 7
        %v1338 = vsub.s32 2, %v1337
        %v1339 = vrot.slane %v1330, %v1338
        %v1342 = vpack.c.bf16 %v1335, %v1335
        %v1343 = vpack.c.bf16 %v1339, %v1339
        %v1344 = vld [vmem:[%s246] sm:$0xf]
        %v1346 = vpack.i.b16 %v1342, %v1342
        %v1348 = vlaneseq
        %v1349 = vshrl.u32 %v1348, 7
        %v1350 = vsub.s32 0, %v1349
        %v1351 = vrot.slane %v1346, %v1350
        %v1353 = vpack.i.b16 %v1343, %v1343
        %v1355 = vlaneseq
        %v1356 = vshrl.u32 %v1355, 7
        %v1357 = vsub.s32 0, %v1356
        %v1358 = vrot.slane %v1353, %v1357
        %v1361 = vcombine.low %v1351, %v1358
        %v1363 = vunpack.c.l.s4 1983009808
        %v1364 = vunpack.c.0.s8 %v1363
        %v1365 = vlaneseq
        %v1366 = vshrl.u32 %v1365, 7
        %v1367 = vsub.s32 %v1364, %v1366
        %v1368 = vrot.slane %v1361, %v1367
        %v1370 = vmul.bf16 %v1344, %v1368
        %s1371 = scalar_lea.vmem %s2, 32
        %v1372 = vld [vmem:[%s1371] sm:$0xf]
        %v1375 = vunpack.c.l.s4 1983009808
        %v1376 = vunpack.c.0.s8 %v1375
        %v1377 = vlaneseq
        %v1378 = vshrl.u32 %v1377, 7
        %v1379 = vsub.s32 %v1376, %v1378
        %v1380 = vrot.slane %v1370, %v1379
        %v1381 = vcombine.high %v1380, %v1380
        %1382 = vrot.lane.b32.xlu0 %v1380, 90
        %v1383 = vpop.permute.xlu0 %1382
        %1384 = vrot.lane.b32.xlu0 %v1381, 90
        %v1385 = vpop.permute.xlu0 %1384
        %vm1386 = vcmask 736256
        %v1387 = vsel %vm1386, %v1383, %v1385
        %v1389 = vsel %vm519, %v1372, 0
        %v1392 = vsel %vm523, %v1387, 0
        %v1395 = vsel %vm523, %v1385, 0
        %1397 = vmatprep.subr.bf16.mxu0 %v1395
        %1398 = vmatpush1.bf16.msra.mxu0 %v1392
        %1399 = vmatprep.subr.bf16.mxu0 0
        %1400 = vmatpush1.bf16.msra.mxu0 0
        %1401 = vmatprep.subr.bf16.mxu0 0
        %1402 = vmatpush1.bf16.msra.mxu0 0
        %1403 = vmatprep.subr.bf16.mxu0 0
        %1404 = vmatpush1.bf16.msra.mxu0 0
        %1405 = vmatprep.subr.bf16.mxu0 0
        %1406 = vmatpush1.bf16.msra.mxu0 0
        %1407 = vmatprep.subr.bf16.mxu0 0
        %1408 = vmatpush1.bf16.msra.mxu0 0
        %1409 = vmatprep.subr.bf16.mxu0 0
        %1410 = vmatpush1.bf16.msra.mxu0 0
        %1411 = vmatprep.subr.bf16.mxu0 0
        %1412 = vmatpush1.bf16.msra.mxu0 0
        %1413 = vmatprep.subr.bf16.mxu0 0
        %1414 = vmatpush1.bf16.msra.mxu0 0
        %1415 = vmatprep.subr.bf16.mxu0 0
        %1416 = vmatpush1.bf16.msra.mxu0 0
        %1417 = vmatprep.subr.bf16.mxu0 0
        %1418 = vmatpush1.bf16.msra.mxu0 0
        %1419 = vmatprep.subr.bf16.mxu0 0
        %1420 = vmatpush1.bf16.msra.mxu0 0
        %1421 = vmatprep.subr.bf16.mxu0 0
        %1422 = vmatpush1.bf16.msra.mxu0 0
        %1423 = vmatprep.subr.bf16.mxu0 0
        %1424 = vmatpush1.bf16.msra.mxu0 0
        %1425 = vmatprep.subr.bf16.mxu0 0
        %1426 = vmatpush1.bf16.msra.mxu0 0
        %1427 = vmatprep.subr.bf16.mxu0 0
        %1428 = vmatpush1.bf16.msra.mxu0 0
        %1429 = vmatprep.mubr.bf16.mxu0 0
        %1430 = vmatmul.mubr.bf16.gmra.mrb[0].mxu0 %v1389
        %v1431 = vpop.f32.mrb[0].mxu0
        %v1432 = vadd.f32 0.0, %v1431
        %v1433 = vpop.f32.mrb[0].mxu0
        %v1434 = vadd.f32 0.0, %v1433
        %v1435 = vpop.f32.mrb[0].mxu0
        %v1436 = vpop.f32.mrb[0].mxu0
        %1437 = vdwg.mxu0
        %v1438 = vadd.f32 %v1322, %v1432
        %v1439 = vadd.f32 %v1323, %v1434
        %v1440 = vld [vmem:[%s3] sm:$0xff]
        %1442 = vset.pattern.permute.xlu0 0
        %1443 = vperm.xlu0 %1442, %v1440
        %v1444 = vpop.permute.xlu0 %1443
        %v1446 = vadd.f32 %v1438, %v1444
        %v1447 = vadd.f32 %v1439, %v1444
        %v1449 = vcombine.high %v1446, %v1446
        %v1451 = vunpack.c.l.s4 1966171168
        %v1452 = vunpack.c.0.s8 %v1451
        %v1453 = vlaneseq
        %v1454 = vshrl.u32 %v1453, 7
        %v1455 = vsub.s32 %v1452, %v1454
        %v1456 = vrot.slane %v1446, %v1455
        %v1458 = vunpack.c.l.s4 1966171168
        %v1459 = vunpack.c.0.s8 %v1458
        %v1460 = vlaneseq
        %v1461 = vshrl.u32 %v1460, 7
        %v1462 = vsub.s32 %v1459, %v1461
        %v1463 = vrot.slane %v1449, %v1462
        %v1464 = vcombine.high %v1456, %v1456
        %v1465 = vcombine.high %v1463, %v1463
        %v1467 = vunpack.c.l.s4 1966171168
        %v1468 = vunpack.c.0.s8 %v1467
        %v1469 = vlaneseq
        %v1470 = vshrl.u32 %v1469, 7
        %v1471 = vsub.s32 %v1468, %v1470
        %v1472 = vrot.slane %v1456, %v1471
        %v1474 = vunpack.c.l.s4 1966171168
        %v1475 = vunpack.c.0.s8 %v1474
        %v1476 = vlaneseq
        %v1477 = vshrl.u32 %v1476, 7
        %v1478 = vsub.s32 %v1475, %v1477
        %v1479 = vrot.slane %v1463, %v1478
        %v1481 = vunpack.c.l.s4 1966171168
        %v1482 = vunpack.c.0.s8 %v1481
        %v1483 = vlaneseq
        %v1484 = vshrl.u32 %v1483, 7
        %v1485 = vsub.s32 %v1482, %v1484
        %v1486 = vrot.slane %v1464, %v1485
        %v1488 = vunpack.c.l.s4 1966171168
        %v1489 = vunpack.c.0.s8 %v1488
        %v1490 = vlaneseq
        %v1491 = vshrl.u32 %v1490, 7
        %v1492 = vsub.s32 %v1489, %v1491
        %v1493 = vrot.slane %v1465, %v1492
        %v1494 = vcombine.high %v1472, %v1472
        %v1495 = vcombine.high %v1479, %v1479
        %v1496 = vcombine.high %v1486, %v1486
        %v1497 = vcombine.high %v1493, %v1493
        %vm1506 = vcmask 122880
        %1507 = vst.msk [vmem:[%s237] sm:$0x1] %vm1506, %v1472
        %1508 = vst.msk [vmem:[%s237 + $0x8] sm:$0x1] %vm1506, %v1486
        %1509 = vst.msk [vmem:[%s237 + $0x10] sm:$0x1] %vm1506, %v1494
        %1510 = vst.msk [vmem:[%s237 + $0x18] sm:$0x1] %vm1506, %v1496
        %1511 = vst.msk [vmem:[%s237 + $0x20] sm:$0x1] %vm1506, %v1479
        %1512 = vst.msk [vmem:[%s237 + $0x28] sm:$0x1] %vm1506, %v1493
        %1513 = vst.msk [vmem:[%s237 + $0x30] sm:$0x1] %vm1506, %v1495
        %1514 = vst.msk [vmem:[%s237 + $0x38] sm:$0x1] %vm1506, %v1497
        %v1515 = vlaneseq
        %v1516 = vshrl.u32 %v1515, 7
        %v1517 = vsub.s32 0, %v1516
        %v1518 = vrot.slane %v1472, %v1517
        %v1519 = vlaneseq
        %v1520 = vshrl.u32 %v1519, 7
        %v1521 = vsub.s32 0, %v1520
        %v1522 = vrot.slane %v1486, %v1521
        %v1523 = vlaneseq
        %v1524 = vshrl.u32 %v1523, 7
        %v1525 = vsub.s32 0, %v1524
        %v1526 = vrot.slane %v1494, %v1525
        %v1527 = vlaneseq
        %v1528 = vshrl.u32 %v1527, 7
        %v1529 = vsub.s32 0, %v1528
        %v1530 = vrot.slane %v1496, %v1529
        %v1531 = vlaneseq
        %v1532 = vshrl.u32 %v1531, 7
        %v1533 = vsub.s32 0, %v1532
        %v1534 = vrot.slane %v1479, %v1533
        %v1535 = vlaneseq
        %v1536 = vshrl.u32 %v1535, 7
        %v1537 = vsub.s32 0, %v1536
        %v1538 = vrot.slane %v1493, %v1537
        %v1539 = vlaneseq
        %v1540 = vshrl.u32 %v1539, 7
        %v1541 = vsub.s32 0, %v1540
        %v1542 = vrot.slane %v1495, %v1541
        %v1543 = vlaneseq
        %v1544 = vshrl.u32 %v1543, 7
        %v1545 = vsub.s32 0, %v1544
        %v1546 = vrot.slane %v1497, %v1545
        %1547 = vrot.lane.b32.xlu0 %v1518, 110
        %v1548 = vpop.permute.xlu0 %1547
        %1549 = vrot.lane.b32.xlu0 %v1522, 110
        %v1550 = vpop.permute.xlu0 %1549
        %1551 = vrot.lane.b32.xlu0 %v1526, 110
        %v1552 = vpop.permute.xlu0 %1551
        %1553 = vrot.lane.b32.xlu0 %v1530, 110
        %v1554 = vpop.permute.xlu0 %1553
        %1555 = vrot.lane.b32.xlu0 %v1534, 110
        %v1556 = vpop.permute.xlu0 %1555
        %1557 = vrot.lane.b32.xlu0 %v1538, 110
        %v1558 = vpop.permute.xlu0 %1557
        %1559 = vrot.lane.b32.xlu0 %v1542, 110
        %v1560 = vpop.permute.xlu0 %1559
        %1561 = vrot.lane.b32.xlu0 %v1546, 110
        %v1562 = vpop.permute.xlu0 %1561
        %1571 = vst.msk [vmem:[%s237 + $0x1] sm:$0x1] %vm1506, %v1548
        %1572 = vst.msk [vmem:[%s237 + $0x9] sm:$0x1] %vm1506, %v1550
        %1573 = vst.msk [vmem:[%s237 + $0x11] sm:$0x1] %vm1506, %v1552
        %1574 = vst.msk [vmem:[%s237 + $0x19] sm:$0x1] %vm1506, %v1554
        %1575 = vst.msk [vmem:[%s237 + $0x21] sm:$0x1] %vm1506, %v1556
        %1576 = vst.msk [vmem:[%s237 + $0x29] sm:$0x1] %vm1506, %v1558
        %1577 = vst.msk [vmem:[%s237 + $0x31] sm:$0x1] %vm1506, %v1560
        %1578 = vst.msk [vmem:[%s237 + $0x39] sm:$0x1] %vm1506, %v1562
        %1579 = vrot.lane.b32.xlu0 %v1518, 92
        %v1580 = vpop.permute.xlu0 %1579
        %1581 = vrot.lane.b32.xlu0 %v1522, 92
        %v1582 = vpop.permute.xlu0 %1581
        %1583 = vrot.lane.b32.xlu0 %v1526, 92
        %v1584 = vpop.permute.xlu0 %1583
        %1585 = vrot.lane.b32.xlu0 %v1530, 92
        %v1586 = vpop.permute.xlu0 %1585
        %1587 = vrot.lane.b32.xlu0 %v1534, 92
        %v1588 = vpop.permute.xlu0 %1587
        %1589 = vrot.lane.b32.xlu0 %v1538, 92
        %v1590 = vpop.permute.xlu0 %1589
        %1591 = vrot.lane.b32.xlu0 %v1542, 92
        %v1592 = vpop.permute.xlu0 %1591
        %1593 = vrot.lane.b32.xlu0 %v1546, 92
        %v1594 = vpop.permute.xlu0 %1593
        %1603 = vst.msk [vmem:[%s237 + $0x2] sm:$0x1] %vm1506, %v1580
        %1604 = vst.msk [vmem:[%s237 + $0xa] sm:$0x1] %vm1506, %v1582
        %1605 = vst.msk [vmem:[%s237 + $0x12] sm:$0x1] %vm1506, %v1584
        %1606 = vst.msk [vmem:[%s237 + $0x1a] sm:$0x1] %vm1506, %v1586
        %1607 = vst.msk [vmem:[%s237 + $0x22] sm:$0x1] %vm1506, %v1588
        %1608 = vst.msk [vmem:[%s237 + $0x2a] sm:$0x1] %vm1506, %v1590
        %1609 = vst.msk [vmem:[%s237 + $0x32] sm:$0x1] %vm1506, %v1592
        %1610 = vst.msk [vmem:[%s237 + $0x3a] sm:$0x1] %vm1506, %v1594
        %1611 = vrot.lane.b32.xlu0 %v1518, 74
        %v1612 = vpop.permute.xlu0 %1611
        %1613 = vrot.lane.b32.xlu0 %v1522, 74
        %v1614 = vpop.permute.xlu0 %1613
        %1615 = vrot.lane.b32.xlu0 %v1526, 74
        %v1616 = vpop.permute.xlu0 %1615
        %1617 = vrot.lane.b32.xlu0 %v1530, 74
        %v1618 = vpop.permute.xlu0 %1617
        %1619 = vrot.lane.b32.xlu0 %v1534, 74
        %v1620 = vpop.permute.xlu0 %1619
        %1621 = vrot.lane.b32.xlu0 %v1538, 74
        %v1622 = vpop.permute.xlu0 %1621
        %1623 = vrot.lane.b32.xlu0 %v1542, 74
        %v1624 = vpop.permute.xlu0 %1623
        %1625 = vrot.lane.b32.xlu0 %v1546, 74
        %v1626 = vpop.permute.xlu0 %1625
        %1635 = vst.msk [vmem:[%s237 + $0x3] sm:$0x1] %vm1506, %v1612
        %1636 = vst.msk [vmem:[%s237 + $0xb] sm:$0x1] %vm1506, %v1614
        %1637 = vst.msk [vmem:[%s237 + $0x13] sm:$0x1] %vm1506, %v1616
        %1638 = vst.msk [vmem:[%s237 + $0x1b] sm:$0x1] %vm1506, %v1618
        %1639 = vst.msk [vmem:[%s237 + $0x23] sm:$0x1] %vm1506, %v1620
        %1640 = vst.msk [vmem:[%s237 + $0x2b] sm:$0x1] %vm1506, %v1622
        %1641 = vst.msk [vmem:[%s237 + $0x33] sm:$0x1] %vm1506, %v1624
        %1642 = vst.msk [vmem:[%s237 + $0x3b] sm:$0x1] %vm1506, %v1626
        %1643 = vrot.lane.b32.xlu0 %v1518, 56
        %v1644 = vpop.permute.xlu0 %1643
        %1645 = vrot.lane.b32.xlu0 %v1522, 56
        %v1646 = vpop.permute.xlu0 %1645
        %1647 = vrot.lane.b32.xlu0 %v1526, 56
        %v1648 = vpop.permute.xlu0 %1647
        %1649 = vrot.lane.b32.xlu0 %v1530, 56
        %v1650 = vpop.permute.xlu0 %1649
        %1651 = vrot.lane.b32.xlu0 %v1534, 56
        %v1652 = vpop.permute.xlu0 %1651
        %1653 = vrot.lane.b32.xlu0 %v1538, 56
        %v1654 = vpop.permute.xlu0 %1653
        %1655 = vrot.lane.b32.xlu0 %v1542, 56
        %v1656 = vpop.permute.xlu0 %1655
        %1657 = vrot.lane.b32.xlu0 %v1546, 56
        %v1658 = vpop.permute.xlu0 %1657
        %1667 = vst.msk [vmem:[%s237 + $0x4] sm:$0x1] %vm1506, %v1644
        %1668 = vst.msk [vmem:[%s237 + $0xc] sm:$0x1] %vm1506, %v1646
        %1669 = vst.msk [vmem:[%s237 + $0x14] sm:$0x1] %vm1506, %v1648
        %1670 = vst.msk [vmem:[%s237 + $0x1c] sm:$0x1] %vm1506, %v1650
        %1671 = vst.msk [vmem:[%s237 + $0x24] sm:$0x1] %vm1506, %v1652
        %1672 = vst.msk [vmem:[%s237 + $0x2c] sm:$0x1] %vm1506, %v1654
        %1673 = vst.msk [vmem:[%s237 + $0x34] sm:$0x1] %vm1506, %v1656
        %1674 = vst.msk [vmem:[%s237 + $0x3c] sm:$0x1] %vm1506, %v1658
        %1675 = vrot.lane.b32.xlu0 %v1518, 38
        %v1676 = vpop.permute.xlu0 %1675
        %1677 = vrot.lane.b32.xlu0 %v1522, 38
        %v1678 = vpop.permute.xlu0 %1677
        %1679 = vrot.lane.b32.xlu0 %v1526, 38
        %v1680 = vpop.permute.xlu0 %1679
        %1681 = vrot.lane.b32.xlu0 %v1530, 38
        %v1682 = vpop.permute.xlu0 %1681
        %1683 = vrot.lane.b32.xlu0 %v1534, 38
        %v1684 = vpop.permute.xlu0 %1683
        %1685 = vrot.lane.b32.xlu0 %v1538, 38
        %v1686 = vpop.permute.xlu0 %1685
        %1687 = vrot.lane.b32.xlu0 %v1542, 38
        %v1688 = vpop.permute.xlu0 %1687
        %1689 = vrot.lane.b32.xlu0 %v1546, 38
        %v1690 = vpop.permute.xlu0 %1689
        %1699 = vst.msk [vmem:[%s237 + $0x5] sm:$0x1] %vm1506, %v1676
        %1700 = vst.msk [vmem:[%s237 + $0xd] sm:$0x1] %vm1506, %v1678
        %1701 = vst.msk [vmem:[%s237 + $0x15] sm:$0x1] %vm1506, %v1680
        %1702 = vst.msk [vmem:[%s237 + $0x1d] sm:$0x1] %vm1506, %v1682
        %1703 = vst.msk [vmem:[%s237 + $0x25] sm:$0x1] %vm1506, %v1684
        %1704 = vst.msk [vmem:[%s237 + $0x2d] sm:$0x1] %vm1506, %v1686
        %1705 = vst.msk [vmem:[%s237 + $0x35] sm:$0x1] %vm1506, %v1688
        %1706 = vst.msk [vmem:[%s237 + $0x3d] sm:$0x1] %vm1506, %v1690
        %1707 = vrot.lane.b32.xlu0 %v1518, 20
        %v1708 = vpop.permute.xlu0 %1707
        %1709 = vrot.lane.b32.xlu0 %v1522, 20
        %v1710 = vpop.permute.xlu0 %1709
        %1711 = vrot.lane.b32.xlu0 %v1526, 20
        %v1712 = vpop.permute.xlu0 %1711
        %1713 = vrot.lane.b32.xlu0 %v1530, 20
        %v1714 = vpop.permute.xlu0 %1713
        %1715 = vrot.lane.b32.xlu0 %v1534, 20
        %v1716 = vpop.permute.xlu0 %1715
        %1717 = vrot.lane.b32.xlu0 %v1538, 20
        %v1718 = vpop.permute.xlu0 %1717
        %1719 = vrot.lane.b32.xlu0 %v1542, 20
        %v1720 = vpop.permute.xlu0 %1719
        %1721 = vrot.lane.b32.xlu0 %v1546, 20
        %v1722 = vpop.permute.xlu0 %1721
        %1731 = vst.msk [vmem:[%s237 + $0x6] sm:$0x1] %vm1506, %v1708
        %1732 = vst.msk [vmem:[%s237 + $0xe] sm:$0x1] %vm1506, %v1710
        %1733 = vst.msk [vmem:[%s237 + $0x16] sm:$0x1] %vm1506, %v1712
        %1734 = vst.msk [vmem:[%s237 + $0x1e] sm:$0x1] %vm1506, %v1714
        %1735 = vst.msk [vmem:[%s237 + $0x26] sm:$0x1] %vm1506, %v1716
        %1736 = vst.msk [vmem:[%s237 + $0x2e] sm:$0x1] %vm1506, %v1718
        %1737 = vst.msk [vmem:[%s237 + $0x36] sm:$0x1] %vm1506, %v1720
        %1738 = vst.msk [vmem:[%s237 + $0x3e] sm:$0x1] %vm1506, %v1722
        %v1740 = vcombine.low %v1446, %v1447
        %v1741 = vcombine.high %v1446, %v1447
        %v1743 = vunpack.c.l.s4 1966171168
        %v1744 = vunpack.c.0.s8 %v1743
        %v1745 = vlaneseq
        %v1746 = vshrl.u32 %v1745, 7
        %v1747 = vsub.s32 %v1744, %v1746
        %v1748 = vrot.slane %v1740, %v1747
        %v1750 = vunpack.c.l.s4 1966171168
        %v1751 = vunpack.c.0.s8 %v1750
        %v1752 = vlaneseq
        %v1753 = vshrl.u32 %v1752, 7
        %v1754 = vsub.s32 %v1751, %v1753
        %v1755 = vrot.slane %v1741, %v1754
        %v1756 = vcombine.high %v1748, %v1748
        %v1757 = vcombine.high %v1755, %v1755
        %v1759 = vunpack.c.l.s4 1966171168
        %v1760 = vunpack.c.0.s8 %v1759
        %v1761 = vlaneseq
        %v1762 = vshrl.u32 %v1761, 7
        %v1763 = vsub.s32 %v1760, %v1762
        %v1764 = vrot.slane %v1748, %v1763
        %v1766 = vunpack.c.l.s4 1966171168
        %v1767 = vunpack.c.0.s8 %v1766
        %v1768 = vlaneseq
        %v1769 = vshrl.u32 %v1768, 7
        %v1770 = vsub.s32 %v1767, %v1769
        %v1771 = vrot.slane %v1755, %v1770
        %v1773 = vunpack.c.l.s4 1966171168
        %v1774 = vunpack.c.0.s8 %v1773
        %v1775 = vlaneseq
        %v1776 = vshrl.u32 %v1775, 7
        %v1777 = vsub.s32 %v1774, %v1776
        %v1778 = vrot.slane %v1756, %v1777
        %v1780 = vunpack.c.l.s4 1966171168
        %v1781 = vunpack.c.0.s8 %v1780
        %v1782 = vlaneseq
        %v1783 = vshrl.u32 %v1782, 7
        %v1784 = vsub.s32 %v1781, %v1783
        %v1785 = vrot.slane %v1757, %v1784
        %v1786 = vcombine.high %v1764, %v1764
        %v1787 = vcombine.high %v1771, %v1771
        %v1788 = vcombine.high %v1778, %v1778
        %v1789 = vcombine.high %v1785, %v1785
        %v1790 = vlaneseq
        %v1791 = vshrl.u32 %v1790, 7
        %v1792 = vsub.s32 0, %v1791
        %v1793 = vrot.slane %v1764, %v1792
        %v1794 = vlaneseq
        %v1795 = vshrl.u32 %v1794, 7
        %v1796 = vsub.s32 1, %v1795
        %v1797 = vrot.slane %v1764, %v1796
        %v1798 = vlaneseq
        %v1799 = vshrl.u32 %v1798, 7
        %v1800 = vsub.s32 0, %v1799
        %v1801 = vrot.slane %v1778, %v1800
        %v1802 = vlaneseq
        %v1803 = vshrl.u32 %v1802, 7
        %v1804 = vsub.s32 1, %v1803
        %v1805 = vrot.slane %v1778, %v1804
        %v1806 = vlaneseq
        %v1807 = vshrl.u32 %v1806, 7
        %v1808 = vsub.s32 0, %v1807
        %v1809 = vrot.slane %v1786, %v1808
        %v1810 = vlaneseq
        %v1811 = vshrl.u32 %v1810, 7
        %v1812 = vsub.s32 1, %v1811
        %v1813 = vrot.slane %v1786, %v1812
        %v1814 = vlaneseq
        %v1815 = vshrl.u32 %v1814, 7
        %v1816 = vsub.s32 0, %v1815
        %v1817 = vrot.slane %v1788, %v1816
        %v1818 = vlaneseq
        %v1819 = vshrl.u32 %v1818, 7
        %v1820 = vsub.s32 1, %v1819
        %v1821 = vrot.slane %v1788, %v1820
        %v1822 = vlaneseq
        %v1823 = vshrl.u32 %v1822, 7
        %v1824 = vsub.s32 0, %v1823
        %v1825 = vrot.slane %v1771, %v1824
        %v1826 = vlaneseq
        %v1827 = vshrl.u32 %v1826, 7
        %v1828 = vsub.s32 1, %v1827
        %v1829 = vrot.slane %v1771, %v1828
        %v1830 = vlaneseq
        %v1831 = vshrl.u32 %v1830, 7
        %v1832 = vsub.s32 0, %v1831
        %v1833 = vrot.slane %v1785, %v1832
        %v1834 = vlaneseq
        %v1835 = vshrl.u32 %v1834, 7
        %v1836 = vsub.s32 1, %v1835
        %v1837 = vrot.slane %v1785, %v1836
        %v1838 = vlaneseq
        %v1839 = vshrl.u32 %v1838, 7
        %v1840 = vsub.s32 0, %v1839
        %v1841 = vrot.slane %v1787, %v1840
        %v1842 = vlaneseq
        %v1843 = vshrl.u32 %v1842, 7
        %v1844 = vsub.s32 1, %v1843
        %v1845 = vrot.slane %v1787, %v1844
        %v1846 = vlaneseq
        %v1847 = vshrl.u32 %v1846, 7
        %v1848 = vsub.s32 0, %v1847
        %v1849 = vrot.slane %v1789, %v1848
        %v1850 = vlaneseq
        %v1851 = vshrl.u32 %v1850, 7
        %v1852 = vsub.s32 1, %v1851
        %v1853 = vrot.slane %v1789, %v1852
        %1854 = vrot.lane.b32.xlu0 %v1793, 2
        %v1855 = vpop.permute.xlu0 %1854
        %1856 = vrot.lane.b32.xlu0 %v1797, 2
        %v1857 = vpop.permute.xlu0 %1856
        %1858 = vrot.lane.b32.xlu0 %v1801, 2
        %v1859 = vpop.permute.xlu0 %1858
        %1860 = vrot.lane.b32.xlu0 %v1805, 2
        %v1861 = vpop.permute.xlu0 %1860
        %1862 = vrot.lane.b32.xlu0 %v1809, 2
        %v1863 = vpop.permute.xlu0 %1862
        %1864 = vrot.lane.b32.xlu0 %v1813, 2
        %v1865 = vpop.permute.xlu0 %1864
        %1866 = vrot.lane.b32.xlu0 %v1817, 2
        %v1867 = vpop.permute.xlu0 %1866
        %1868 = vrot.lane.b32.xlu0 %v1821, 2
        %v1869 = vpop.permute.xlu0 %1868
        %1870 = vrot.lane.b32.xlu0 %v1825, 2
        %v1871 = vpop.permute.xlu0 %1870
        %1872 = vrot.lane.b32.xlu0 %v1829, 2
        %v1873 = vpop.permute.xlu0 %1872
        %1874 = vrot.lane.b32.xlu0 %v1833, 2
        %v1875 = vpop.permute.xlu0 %1874
        %1876 = vrot.lane.b32.xlu0 %v1837, 2
        %v1877 = vpop.permute.xlu0 %1876
        %1878 = vrot.lane.b32.xlu0 %v1841, 2
        %v1879 = vpop.permute.xlu0 %1878
        %1880 = vrot.lane.b32.xlu0 %v1845, 2
        %v1881 = vpop.permute.xlu0 %1880
        %1882 = vrot.lane.b32.xlu0 %v1849, 2
        %v1883 = vpop.permute.xlu0 %1882
        %1884 = vrot.lane.b32.xlu0 %v1853, 2
        %v1885 = vpop.permute.xlu0 %1884
        %v1886 = vsel %vm633, %v1855, %v1857
        %v1887 = vsel %vm633, %v1859, %v1861
        %v1888 = vsel %vm633, %v1863, %v1865
        %v1889 = vsel %vm633, %v1867, %v1869
        %v1890 = vsel %vm633, %v1871, %v1873
        %v1891 = vsel %vm633, %v1875, %v1877
        %v1892 = vsel %vm633, %v1879, %v1881
        %v1893 = vsel %vm633, %v1883, %v1885
        %1902 = vst.msk [vmem:[%s237 + $0x7] sm:$0x1] %vm1506, %v1886
        %1903 = vst.msk [vmem:[%s237 + $0xf] sm:$0x1] %vm1506, %v1887
        %1904 = vst.msk [vmem:[%s237 + $0x17] sm:$0x1] %vm1506, %v1888
        %1905 = vst.msk [vmem:[%s237 + $0x1f] sm:$0x1] %vm1506, %v1889
        %1906 = vst.msk [vmem:[%s237 + $0x27] sm:$0x1] %vm1506, %v1890
        %1907 = vst.msk [vmem:[%s237 + $0x2f] sm:$0x1] %vm1506, %v1891
        %1908 = vst.msk [vmem:[%s237 + $0x37] sm:$0x1] %vm1506, %v1892
        %1909 = vst.msk [vmem:[%s237 + $0x3f] sm:$0x1] %vm1506, %v1893
        %s1910 = sand.u32 %s138, 1
        %s1911 = scalar_lea.sflag [#allocation3], %s1910
        %s1912 = sand.u32 %s138, 1
        %s1913 = smul.addr %s1912, 64
        %s1914 = scalar_lea.vmem [#allocation2], %s1913
        // Predicated region
        $region37: #{tpu_custom_call.1} parent=35 // pred_check
          %p1915 = pneg %p148
        $region38: #{tpu_custom_call.1} parent=35 // pred_check_branch
          %1917 = sbr.rel (%p1915) target = $region40
        $region39: #{tpu_custom_call.1} parent=35 // pred_region
          %s1919 = ssub.s32 1024, 1024
          %1920 = vsyncadd %s1911, %s1919
          %s1921 = smul.addr %s22, 16
          %s1922 = sadd.s32 %s23, %s1921
          %s1923 = smul.addr %s1922, 128
          %s1924 = scalar_lea.hbm %s4, %s1923
          %s1925 = sshll.u32 %s1914, 4
          %s1926 = int_to_ptr.vmem [resolvable:$true] %s1925
          %1931 = dma.vmem_to_hbm [thread:$0]  %s1926, 1024, %s1924, %s1911, 128, 256, 8
        $region40: #{tpu_custom_call.1} parent=35 // pred_fallthru
          _
      $region36: #{tpu_custom_call.1} parent=5 // pred_fallthru
        _
      %p1932 = scmp.le.s32.totalorder 2, %s13
      // Predicated region
      $region41: #{tpu_custom_call.1} parent=5 // pred_check
        %p1933 = pneg %p1932
      $region42: #{tpu_custom_call.1} parent=5 // pred_check_branch
        %1935 = sbr.rel (%p1933) target = $region44
      $region43: #{tpu_custom_call.1} parent=5 // pred_region
        %s1936 = ssub.s32 %s13, 2
        // Predicated region
        $region45: #{tpu_custom_call.1} parent=43 // pred_check
          %p1937 = pneg %p154
        $region46: #{tpu_custom_call.1} parent=43 // pred_check_branch
          %1939 = sbr.rel (%p1937) target = $region48
        $region47: #{tpu_custom_call.1} parent=43 // pred_region
          %s1940 = sand.u32 %s139, 1
          %s1941 = scalar_lea.sflag [#allocation3], %s1940
          %s1942 = sand.u32 %s139, 1
          %s1943 = smul.addr %s1942, 64
          %s1944 = scalar_lea.vmem [#allocation2], %s1943
          %1945 = dma.done %s1941, 1024
        $region48: #{tpu_custom_call.1} parent=43 // pred_fallthru
          _
      $region44: #{tpu_custom_call.1} parent=5 // pred_fallthru
        _
    $region6: #{tpu_custom_call.1} parent=1 // loop_footer
      %s17 = sadd.s32 1, %s13
    $region7: #{tpu_custom_call.1} parent=1 // loop_footer_branch
      %12 = sbr.rel target = $region3
    $region8: #{tpu_custom_call.1} parent=1 // loop_exit
      _
    %1946 = vsyncpa [#allocation3], 1
    %s1947 = scalar_lea.sflag [#allocation3], 1
    %1948 = vsyncpa %s1947, 1

</llo_original>
